<compile_context>
chip_gen: v6e
topology: v6e:2x2x1
jax: 0.10.0
libtpu: 0.0.40
codegen_flags: <defaults>
</compile_context>

<pallas_src>
import functools
import math

import jax
import jax.numpy as jnp
from jax import lax
from jax.experimental import pallas as pl
from jax.experimental.pallas import tpu as pltpu


def _attn_fusion_kernel(d_model, row_tile,
                        f0_ref, f1_ref, f2_ref,
                        wq_ref, bq_ref,
                        wkv0_ref, bkv0_ref,
                        wkv1_ref, bkv1_ref,
                        wkv2_ref, bkv2_ref,
                        wo_ref, bo_ref,
                        out_ref):
    d = d_model
    row0 = pl.multiple_of(pl.program_id(0) * row_tile, row_tile)

    # q projection: only this grid step's query rows.  The 1/sqrt(d_model) scale is
    # folded into wq / bq host-side, so no per-score scaling is needed later.
    q = (jnp.dot(f0_ref[pl.ds(row0, row_tile), :], wq_ref[...],
                 preferred_element_type=jnp.float32)
         + bq_ref[...]).astype(jnp.bfloat16)                          # [tq, d]

    # K/V projections for ALL rows (every query tile attends over all N keys).
    # bf16 operands, f32 accumulation.  One dense dot per feature: no zero
    # block-diagonal padding, no host-side concatenation of the features.
    kv0 = (jnp.dot(f0_ref[...], wkv0_ref[...], preferred_element_type=jnp.float32)
           + bkv0_ref[...])                                            # [N, 2d] = [k0 | v0]
    kv1 = (jnp.dot(f1_ref[...], wkv1_ref[...], preferred_element_type=jnp.float32)
           + bkv1_ref[...])
    kv2 = (jnp.dot(f2_ref[...], wkv2_ref[...], preferred_element_type=jnp.float32)
           + bkv2_ref[...])

    def attend(kv):
        # Lane slices are 128-aligned when d_model % 128 == 0 (recommended layout).
        k = kv[:, 0:d].astype(jnp.bfloat16)
        v = kv[:, d:2 * d].astype(jnp.bfloat16)
        # Contract feature dims of q and k directly (no explicit transpose / XLU pass).
        s = lax.dot_general(q, k, (((1,), (1,)), ((), ())),
                            preferred_element_type=jnp.float32)        # [tq, N] f32
        m = jnp.max(s, axis=-1, keepdims=True)
        e = jnp.exp(s - m)                                             # softmax math in f32
        p = e * pl.reciprocal(jnp.sum(e, axis=-1, keepdims=True), approx=True)
        return jnp.dot(p.astype(jnp.bfloat16), v,
                       preferred_element_type=jnp.float32)             # [tq, d] f32

    ctx = attend(kv0) + attend(kv1) + attend(kv2)

    out = (jnp.dot(ctx.astype(jnp.bfloat16), wo_ref[...],
                   preferred_element_type=jnp.float32) + bo_ref[...])
    # ReLU; dropout is identity at inference.
    out_ref[...] = jnp.maximum(out, 0.0).astype(out_ref.dtype)


def pack_attention_fusion_params(params, d_in, d_model, weight_dtype=jnp.bfloat16):
    """Host-side, one-time packing of the 8 linear layers.

    params: dict with wq,bq,wk0,bk0,wv0,bv0,wk1,bk1,wv1,bv1,wk2,bk2,wv2,bv2,wo,bo
            (weights stored as [d_in, d_model] / [d_model, d_model], biases as [1, d_model]).
    Returns per-feature [k_i | v_i] weight slabs (no zero blocks), bf16 weights,
    f32 biases, and the 1/sqrt(d_model) scale folded into wq / bq.
    """
    scale = 1.0 / math.sqrt(float(d_model))

    def kv(i):
        w = jnp.concatenate([params[f"wk{i}"], params[f"wv{i}"]], axis=1)
        b = jnp.concatenate([params[f"bk{i}"], params[f"bv{i}"]], axis=1)
        return w.astype(weight_dtype), b.astype(jnp.float32)

    wkv0, bkv0 = kv(0)
    wkv1, bkv1 = kv(1)
    wkv2, bkv2 = kv(2)
    return {
        "wq": (params["wq"] * scale).astype(weight_dtype),
        "bq": (params["bq"] * scale).astype(jnp.float32),
        "wkv0": wkv0, "bkv0": bkv0,
        "wkv1": wkv1, "bkv1": bkv1,
        "wkv2": wkv2, "bkv2": bkv2,
        "wo": params["wo"].astype(weight_dtype),
        "bo": params["bo"].astype(jnp.float32),
    }


def attention_fusion_layer(feat_0, feat_1, feat_2, packed, *, row_tile=None):
    """packed: output of pack_attention_fusion_params."""
    N, d_in = feat_0.shape
    d_model = packed["wo"].shape[1]

    # Pick a query-row tile: multiple of 8 that divides N, else a single full block.
    if row_tile is None:
        row_tile = min(N, 256)
    row_tile = min(row_tile, N)
    if N % row_tile != 0 or row_tile % 8 != 0:
        row_tile = N
    grid_n = N // row_tile

    # Producer-side cast to bf16 (halves activation DMA bytes, doubles MXU rate).
    f0 = feat_0.astype(jnp.bfloat16)
    f1 = feat_1.astype(jnp.bfloat16)
    f2 = feat_2.astype(jnp.bfloat16)

    inputs = (f0, f1, f2,
              packed["wq"], packed["bq"],
              packed["wkv0"], packed["bkv0"],
              packed["wkv1"], packed["bkv1"],
              packed["wkv2"], packed["bkv2"],
              packed["wo"], packed["bo"])

    def resident_spec(x):
        # Full block, constant index_map -> DMA'd once, VMEM-resident across the grid.
        return pl.BlockSpec(x.shape, lambda i: (0, 0))

    kernel = functools.partial(_attn_fusion_kernel, d_model, row_tile)

    # Advisory cost estimate (projections are recomputed per row tile).
    flops = (2 * N * d_in * d_model
             + grid_n * 3 * 2 * N * d_in * (2 * d_model)
             + 3 * 2 * (2 * N * N * d_model)
             + 2 * N * d_model * d_model)
    transcendentals = 3 * N * N + 3 * N
    bytes_accessed = (3 * N * d_in * 2
                      + (7 * d_in * d_model + d_model * d_model) * 2
                      + 8 * d_model * 4
                      + N * d_model * 4)

    return pl.pallas_call(
        kernel,
        out_shape=jax.ShapeDtypeStruct((N, d_model), jnp.float32),
        grid=(grid_n,),
        in_specs=[resident_spec(x) for x in inputs],
        out_specs=pl.BlockSpec((row_tile, d_model), lambda i: (i, 0)),
        compiler_params=pltpu.CompilerParams(
            dimension_semantics=("parallel",),
            vmem_limit_bytes=32 * 1024 * 1024),
        cost_estimate=pl.CostEstimate(flops=flops,
                                      transcendentals=transcendentals,
                                      bytes_accessed=bytes_accessed),
    )(*inputs)


def _init_linear(key, d_in, d_out):
    # Deterministic init mimicking nn.Linear's uniform(-1/sqrt(d_in), 1/sqrt(d_in)).
    kw, kb = jax.random.split(key)
    bound = 1.0 / math.sqrt(d_in)
    w = jax.random.uniform(kw, (d_in, d_out), jnp.float32, -bound, bound)
    b = jax.random.uniform(kb, (1, d_out), jnp.float32, -bound, bound)
    return w, b


def _reference(feat_0, feat_1, feat_2, params, d_model, mimic_kernel_dtypes):
    """Pure-JAX reference. mimic_kernel_dtypes=True applies the same bf16 casts
    as the kernel (f32 accumulation) so the comparison isolates kernel logic."""
    scale = 1.0 / math.sqrt(float(d_model))
    cast = (lambda x: x.astype(jnp.bfloat16)) if mimic_kernel_dtypes else (lambda x: x)

    def lin(x, w, b):
        return jnp.dot(cast(x), cast(w), preferred_element_type=jnp.float32) + b

    q = lin(feat_0, params["wq"] * scale, params["bq"] * scale)
    k0 = lin(feat_0, params["wk0"], params["bk0"])
    v0 = lin(feat_0, params["wv0"], params["bv0"])
    k1 = lin(feat_1, params["wk1"], params["bk1"])
    v1 = lin(feat_1, params["wv1"], params["bv1"])
    k2 = lin(feat_2, params["wk2"], params["bk2"])
    v2 = lin(feat_2, params["wv2"], params["bv2"])

    def attend(k, v):
        s = jnp.dot(cast(q), cast(k).T, preferred_element_type=jnp.float32)
        p = jax.nn.softmax(s, axis=-1)
        return jnp.dot(cast(p), cast(v), preferred_element_type=jnp.float32)

    ctx = attend(k0, v0) + attend(k1, v1) + attend(k2, v2)
    out = lin(ctx, params["wo"], params["bo"])
    return jnp.maximum(out, 0.0)


if __name__ == "__main__":
    # d_model chosen as a multiple of 128 so projection slices and output stores are
    # lane-aligned (per review).  N=64 with row_tile=32 exercises a 2-step grid.
    N, d_in, d_model = 64, 16, 128
    dropout_rate = 0.1  # inference: identity

    key = jax.random.PRNGKey(0)
    keys = jax.random.split(key, 16)

    feat_0 = jax.random.normal(keys[0], (N, d_in), jnp.float32)
    feat_1 = jax.random.normal(keys[1], (N, d_in), jnp.float32)
    feat_2 = jax.random.normal(keys[2], (N, d_in), jnp.float32)

    names_in = ["q", "k0", "v0", "k1", "v1", "k2", "v2"]
    params = {}
    for i, nm in enumerate(names_in):
        w, b = _init_linear(keys[3 + i], d_in, d_model)
        params["w" + nm] = w
        params["b" + nm] = b
    wo, bo = _init_linear(keys[3 + len(names_in)], d_model, d_model)
    params["wo"] = wo
    params["bo"] = bo

    # One-time host-side packing (persists across calls).
    packed = pack_attention_fusion_params(params, d_in, d_model)
    packed = jax.tree_util.tree_map(jax.block_until_ready, packed)

    out = attention_fusion_layer(feat_0, feat_1, feat_2, packed, row_tile=32)
    out = jax.block_until_ready(out)

    ref_bf16 = _reference(feat_0, feat_1, feat_2, params, d_model,
                          mimic_kernel_dtypes=True)
    ref_f32 = _reference(feat_0, feat_1, feat_2, params, d_model,
                         mimic_kernel_dtypes=False)

    assert out.shape == (N, d_model)
    # Kernel logic check (same bf16 rounding as the kernel; slack for approx recip).
    assert jnp.allclose(out, ref_bf16, atol=2e-2, rtol=2e-2), "mismatch vs bf16 reference"
    # Sanity check against the full-precision reference (bf16 quantization slack).
    assert jnp.allclose(out, ref_f32, atol=1e-1, rtol=1e-1), "mismatch vs f32 reference"

    print("KERNEL_OK")
</pallas_src>

<mosaic_0001>
module attributes {stable_mosaic.version = 11 : i64} {
  func.func @_attn_fusion_kernel(%arg0: i32, %arg1: memref<64x16xbf16, #tpu.memory_space<vmem>>, %arg2: memref<64x16xbf16, #tpu.memory_space<vmem>>, %arg3: memref<64x16xbf16, #tpu.memory_space<vmem>>, %arg4: memref<16x128xbf16, #tpu.memory_space<vmem>>, %arg5: memref<1x128xf32, #tpu.memory_space<vmem>>, %arg6: memref<16x256xbf16, #tpu.memory_space<vmem>>, %arg7: memref<1x256xf32, #tpu.memory_space<vmem>>, %arg8: memref<16x256xbf16, #tpu.memory_space<vmem>>, %arg9: memref<1x256xf32, #tpu.memory_space<vmem>>, %arg10: memref<16x256xbf16, #tpu.memory_space<vmem>>, %arg11: memref<1x256xf32, #tpu.memory_space<vmem>>, %arg12: memref<128x128xbf16, #tpu.memory_space<vmem>>, %arg13: memref<1x128xf32, #tpu.memory_space<vmem>>, %arg14: memref<32x128xf32, #tpu.memory_space<vmem>>) attributes {dimension_semantics = [#tpu.dimension_semantics<parallel>], iteration_bounds = array<i64: 2>, scalar_prefetch = 0 : i64, scratch_operands = 0 : i64, tpu.core_type = #tpu.core_type<tc>, window_params = [{pipeline_mode = #tpu.pipeline_mode<synchronous>, transform_indices = @transform_0, window_bounds = array<i64: 64, 16>}, {pipeline_mode = #tpu.pipeline_mode<synchronous>, transform_indices = @transform_1, window_bounds = array<i64: 64, 16>}, {pipeline_mode = #tpu.pipeline_mode<synchronous>, transform_indices = @transform_2, window_bounds = array<i64: 64, 16>}, {pipeline_mode = #tpu.pipeline_mode<synchronous>, transform_indices = @transform_3, window_bounds = array<i64: 16, 128>}, {pipeline_mode = #tpu.pipeline_mode<synchronous>, transform_indices = @transform_4, window_bounds = array<i64: 1, 128>}, {pipeline_mode = #tpu.pipeline_mode<synchronous>, transform_indices = @transform_5, window_bounds = array<i64: 16, 256>}, {pipeline_mode = #tpu.pipeline_mode<synchronous>, transform_indices = @transform_6, window_bounds = array<i64: 1, 256>}, {pipeline_mode = #tpu.pipeline_mode<synchronous>, transform_indices = @transform_7, window_bounds = array<i64: 16, 256>}, {pipeline_mode = #tpu.pipeline_mode<synchronous>, transform_indices = @transform_8, window_bounds = array<i64: 1, 256>}, {pipeline_mode = #tpu.pipeline_mode<synchronous>, transform_indices = @transform_9, window_bounds = array<i64: 16, 256>}, {pipeline_mode = #tpu.pipeline_mode<synchronous>, transform_indices = @transform_10, window_bounds = array<i64: 1, 256>}, {pipeline_mode = #tpu.pipeline_mode<synchronous>, transform_indices = @transform_11, window_bounds = array<i64: 128, 128>}, {pipeline_mode = #tpu.pipeline_mode<synchronous>, transform_indices = @transform_12, window_bounds = array<i64: 1, 128>}, {transform_indices = @transform_13, window_bounds = array<i64: 32, 128>}]} {
    %c32_i32 = arith.constant 32 : i32
    %0 = arith.muli %arg0, %c32_i32 : i32
    %1 = tpu.assume_multiple %0, 32 : i32
    %2 = arith.index_cast %1 : i32 to index
    %c0 = arith.constant 0 : index
    %3 = vector.load %arg1[%2, %c0] : memref<64x16xbf16, #tpu.memory_space<vmem>>, vector<32x16xbf16>
    %c0_0 = arith.constant 0 : index
    %c0_1 = arith.constant 0 : index
    %4 = vector.load %arg4[%c0_0, %c0_1] : memref<16x128xbf16, #tpu.memory_space<vmem>>, vector<16x128xbf16>
    %cst = arith.constant dense<0.000000e+00> : vector<32x128xf32>
    %5 = tpu.matmul %3, %4, %cst {dimension_numbers = #tpu.dot_dimension_numbers<[1], [0], [0], [1], [0, 0, 1, 1], [], []>} : vector<32x16xbf16>, vector<16x128xbf16>, vector<32x128xf32> -> vector<32x128xf32>
    %c0_2 = arith.constant 0 : index
    %c0_3 = arith.constant 0 : index
    %6 = vector.load %arg5[%c0_2, %c0_3] : memref<1x128xf32, #tpu.memory_space<vmem>>, vector<1x128xf32>
    %7 = vector.broadcast %6 : vector<1x128xf32> to vector<32x128xf32>
    %8 = arith.addf %5, %7 : vector<32x128xf32>
    %9 = arith.truncf %8 : vector<32x128xf32> to vector<32x128xbf16>
    %c0_4 = arith.constant 0 : index
    %c0_5 = arith.constant 0 : index
    %10 = vector.load %arg1[%c0_4, %c0_5] : memref<64x16xbf16, #tpu.memory_space<vmem>>, vector<64x16xbf16>
    %c0_6 = arith.constant 0 : index
    %c0_7 = arith.constant 0 : index
    %11 = vector.load %arg6[%c0_6, %c0_7] : memref<16x256xbf16, #tpu.memory_space<vmem>>, vector<16x256xbf16>
    %cst_8 = arith.constant dense<0.000000e+00> : vector<64x256xf32>
    %12 = tpu.matmul %10, %11, %cst_8 {dimension_numbers = #tpu.dot_dimension_numbers<[1], [0], [0], [1], [0, 0, 1, 1], [], []>} : vector<64x16xbf16>, vector<16x256xbf16>, vector<64x256xf32> -> vector<64x256xf32>
    %c0_9 = arith.constant 0 : index
    %c0_10 = arith.constant 0 : index
    %13 = vector.load %arg7[%c0_9, %c0_10] : memref<1x256xf32, #tpu.memory_space<vmem>>, vector<1x256xf32>
    %14 = vector.broadcast %13 : vector<1x256xf32> to vector<64x256xf32>
    %15 = arith.addf %12, %14 : vector<64x256xf32>
    %c0_11 = arith.constant 0 : index
    %c0_12 = arith.constant 0 : index
    %16 = vector.load %arg2[%c0_11, %c0_12] : memref<64x16xbf16, #tpu.memory_space<vmem>>, vector<64x16xbf16>
    %c0_13 = arith.constant 0 : index
    %c0_14 = arith.constant 0 : index
    %17 = vector.load %arg8[%c0_13, %c0_14] : memref<16x256xbf16, #tpu.memory_space<vmem>>, vector<16x256xbf16>
    %cst_15 = arith.constant dense<0.000000e+00> : vector<64x256xf32>
    %18 = tpu.matmul %16, %17, %cst_15 {dimension_numbers = #tpu.dot_dimension_numbers<[1], [0], [0], [1], [0, 0, 1, 1], [], []>} : vector<64x16xbf16>, vector<16x256xbf16>, vector<64x256xf32> -> vector<64x256xf32>
    %c0_16 = arith.constant 0 : index
    %c0_17 = arith.constant 0 : index
    %19 = vector.load %arg9[%c0_16, %c0_17] : memref<1x256xf32, #tpu.memory_space<vmem>>, vector<1x256xf32>
    %20 = vector.broadcast %19 : vector<1x256xf32> to vector<64x256xf32>
    %21 = arith.addf %18, %20 : vector<64x256xf32>
    %c0_18 = arith.constant 0 : index
    %c0_19 = arith.constant 0 : index
    %22 = vector.load %arg3[%c0_18, %c0_19] : memref<64x16xbf16, #tpu.memory_space<vmem>>, vector<64x16xbf16>
    %c0_20 = arith.constant 0 : index
    %c0_21 = arith.constant 0 : index
    %23 = vector.load %arg10[%c0_20, %c0_21] : memref<16x256xbf16, #tpu.memory_space<vmem>>, vector<16x256xbf16>
    %cst_22 = arith.constant dense<0.000000e+00> : vector<64x256xf32>
    %24 = tpu.matmul %22, %23, %cst_22 {dimension_numbers = #tpu.dot_dimension_numbers<[1], [0], [0], [1], [0, 0, 1, 1], [], []>} : vector<64x16xbf16>, vector<16x256xbf16>, vector<64x256xf32> -> vector<64x256xf32>
    %c0_23 = arith.constant 0 : index
    %c0_24 = arith.constant 0 : index
    %25 = vector.load %arg11[%c0_23, %c0_24] : memref<1x256xf32, #tpu.memory_space<vmem>>, vector<1x256xf32>
    %26 = vector.broadcast %25 : vector<1x256xf32> to vector<64x256xf32>
    %27 = arith.addf %24, %26 : vector<64x256xf32>
    %28 = vector.extract_strided_slice %15 {offsets = [0, 0], sizes = [64, 128], strides = [1, 1]} : vector<64x256xf32> to vector<64x128xf32>
    %29 = arith.truncf %28 : vector<64x128xf32> to vector<64x128xbf16>
    %30 = vector.extract_strided_slice %15 {offsets = [0, 128], sizes = [64, 128], strides = [1, 1]} : vector<64x256xf32> to vector<64x128xf32>
    %31 = arith.truncf %30 : vector<64x128xf32> to vector<64x128xbf16>
    %cst_25 = arith.constant dense<0.000000e+00> : vector<32x64xf32>
    %32 = tpu.matmul %9, %29, %cst_25 {dimension_numbers = #tpu.dot_dimension_numbers<[1], [1], [0], [0], [0, 0, 1, 0], [], []>} : vector<32x128xbf16>, vector<64x128xbf16>, vector<32x64xf32> -> vector<32x64xf32>
    %cst_26 = arith.constant dense<0xFF800000> : vector<32xf32>
    %33 = vector.multi_reduction <maximumf>, %32, %cst_26 [1] : vector<32x64xf32> to vector<32xf32>
    %34 = vector.shape_cast %33 : vector<32xf32> to vector<32x1xf32>
    %35 = vector.broadcast %34 : vector<32x1xf32> to vector<32x64xf32>
    %36 = arith.subf %32, %35 : vector<32x64xf32>
    %37 = math.exp %36 : vector<32x64xf32>
    %cst_27 = arith.constant dense<0.000000e+00> : vector<32xf32>
    %38 = vector.multi_reduction <add>, %37, %cst_27 [1] : vector<32x64xf32> to vector<32xf32>
    %39 = vector.shape_cast %38 : vector<32xf32> to vector<32x1xf32>
    %40 = tpu.reciprocal %39 {approx = true} : vector<32x1xf32> -> vector<32x1xf32>
    %41 = vector.broadcast %40 : vector<32x1xf32> to vector<32x64xf32>
    %42 = arith.mulf %37, %41 : vector<32x64xf32>
    %43 = arith.truncf %42 : vector<32x64xf32> to vector<32x64xbf16>
    %cst_28 = arith.constant dense<0.000000e+00> : vector<32x128xf32>
    %44 = tpu.matmul %43, %31, %cst_28 {dimension_numbers = #tpu.dot_dimension_numbers<[1], [0], [0], [1], [0, 0, 1, 1], [], []>} : vector<32x64xbf16>, vector<64x128xbf16>, vector<32x128xf32> -> vector<32x128xf32>
    %45 = vector.extract_strided_slice %21 {offsets = [0, 0], sizes = [64, 128], strides = [1, 1]} : vector<64x256xf32> to vector<64x128xf32>
    %46 = arith.truncf %45 : vector<64x128xf32> to vector<64x128xbf16>
    %47 = vector.extract_strided_slice %21 {offsets = [0, 128], sizes = [64, 128], strides = [1, 1]} : vector<64x256xf32> to vector<64x128xf32>
    %48 = arith.truncf %47 : vector<64x128xf32> to vector<64x128xbf16>
    %cst_29 = arith.constant dense<0.000000e+00> : vector<32x64xf32>
    %49 = tpu.matmul %9, %46, %cst_29 {dimension_numbers = #tpu.dot_dimension_numbers<[1], [1], [0], [0], [0, 0, 1, 0], [], []>} : vector<32x128xbf16>, vector<64x128xbf16>, vector<32x64xf32> -> vector<32x64xf32>
    %cst_30 = arith.constant dense<0xFF800000> : vector<32xf32>
    %50 = vector.multi_reduction <maximumf>, %49, %cst_30 [1] : vector<32x64xf32> to vector<32xf32>
    %51 = vector.shape_cast %50 : vector<32xf32> to vector<32x1xf32>
    %52 = vector.broadcast %51 : vector<32x1xf32> to vector<32x64xf32>
    %53 = arith.subf %49, %52 : vector<32x64xf32>
    %54 = math.exp %53 : vector<32x64xf32>
    %cst_31 = arith.constant dense<0.000000e+00> : vector<32xf32>
    %55 = vector.multi_reduction <add>, %54, %cst_31 [1] : vector<32x64xf32> to vector<32xf32>
    %56 = vector.shape_cast %55 : vector<32xf32> to vector<32x1xf32>
    %57 = tpu.reciprocal %56 {approx = true} : vector<32x1xf32> -> vector<32x1xf32>
    %58 = vector.broadcast %57 : vector<32x1xf32> to vector<32x64xf32>
    %59 = arith.mulf %54, %58 : vector<32x64xf32>
    %60 = arith.truncf %59 : vector<32x64xf32> to vector<32x64xbf16>
    %cst_32 = arith.constant dense<0.000000e+00> : vector<32x128xf32>
    %61 = tpu.matmul %60, %48, %cst_32 {dimension_numbers = #tpu.dot_dimension_numbers<[1], [0], [0], [1], [0, 0, 1, 1], [], []>} : vector<32x64xbf16>, vector<64x128xbf16>, vector<32x128xf32> -> vector<32x128xf32>
    %62 = arith.addf %44, %61 : vector<32x128xf32>
    %63 = vector.extract_strided_slice %27 {offsets = [0, 0], sizes = [64, 128], strides = [1, 1]} : vector<64x256xf32> to vector<64x128xf32>
    %64 = arith.truncf %63 : vector<64x128xf32> to vector<64x128xbf16>
    %65 = vector.extract_strided_slice %27 {offsets = [0, 128], sizes = [64, 128], strides = [1, 1]} : vector<64x256xf32> to vector<64x128xf32>
    %66 = arith.truncf %65 : vector<64x128xf32> to vector<64x128xbf16>
    %cst_33 = arith.constant dense<0.000000e+00> : vector<32x64xf32>
    %67 = tpu.matmul %9, %64, %cst_33 {dimension_numbers = #tpu.dot_dimension_numbers<[1], [1], [0], [0], [0, 0, 1, 0], [], []>} : vector<32x128xbf16>, vector<64x128xbf16>, vector<32x64xf32> -> vector<32x64xf32>
    %cst_34 = arith.constant dense<0xFF800000> : vector<32xf32>
    %68 = vector.multi_reduction <maximumf>, %67, %cst_34 [1] : vector<32x64xf32> to vector<32xf32>
    %69 = vector.shape_cast %68 : vector<32xf32> to vector<32x1xf32>
    %70 = vector.broadcast %69 : vector<32x1xf32> to vector<32x64xf32>
    %71 = arith.subf %67, %70 : vector<32x64xf32>
    %72 = math.exp %71 : vector<32x64xf32>
    %cst_35 = arith.constant dense<0.000000e+00> : vector<32xf32>
    %73 = vector.multi_reduction <add>, %72, %cst_35 [1] : vector<32x64xf32> to vector<32xf32>
    %74 = vector.shape_cast %73 : vector<32xf32> to vector<32x1xf32>
    %75 = tpu.reciprocal %74 {approx = true} : vector<32x1xf32> -> vector<32x1xf32>
    %76 = vector.broadcast %75 : vector<32x1xf32> to vector<32x64xf32>
    %77 = arith.mulf %72, %76 : vector<32x64xf32>
    %78 = arith.truncf %77 : vector<32x64xf32> to vector<32x64xbf16>
    %cst_36 = arith.constant dense<0.000000e+00> : vector<32x128xf32>
    %79 = tpu.matmul %78, %66, %cst_36 {dimension_numbers = #tpu.dot_dimension_numbers<[1], [0], [0], [1], [0, 0, 1, 1], [], []>} : vector<32x64xbf16>, vector<64x128xbf16>, vector<32x128xf32> -> vector<32x128xf32>
    %80 = arith.addf %62, %79 : vector<32x128xf32>
    %81 = arith.truncf %80 : vector<32x128xf32> to vector<32x128xbf16>
    %c0_37 = arith.constant 0 : index
    %c0_38 = arith.constant 0 : index
    %82 = vector.load %arg12[%c0_37, %c0_38] : memref<128x128xbf16, #tpu.memory_space<vmem>>, vector<128x128xbf16>
    %cst_39 = arith.constant dense<0.000000e+00> : vector<32x128xf32>
    %83 = tpu.matmul %81, %82, %cst_39 {dimension_numbers = #tpu.dot_dimension_numbers<[1], [0], [0], [1], [0, 0, 1, 1], [], []>} : vector<32x128xbf16>, vector<128x128xbf16>, vector<32x128xf32> -> vector<32x128xf32>
    %c0_40 = arith.constant 0 : index
    %c0_41 = arith.constant 0 : index
    %84 = vector.load %arg13[%c0_40, %c0_41] : memref<1x128xf32, #tpu.memory_space<vmem>>, vector<1x128xf32>
    %85 = vector.broadcast %84 : vector<1x128xf32> to vector<32x128xf32>
    %86 = arith.addf %83, %85 : vector<32x128xf32>
    %cst_42 = arith.constant 0.000000e+00 : f32
    %87 = vector.broadcast %cst_42 : f32 to vector<32x128xf32>
    %88 = arith.maximumf %86, %87 : vector<32x128xf32>
    %c0_43 = arith.constant 0 : index
    %c0_44 = arith.constant 0 : index
    %89 = vector.load %arg14[%c0_43, %c0_44] : memref<32x128xf32, #tpu.memory_space<vmem>>, vector<32x128xf32>
    tpu.vector_store %arg14[%c0_43, %c0_44], %88 {strides = array<i32>} : memref<32x128xf32, #tpu.memory_space<vmem>>, vector<32x128xf32>,
    return
  }
  func.func @transform_0(%arg0: i32) -> (i32, i32) {
    %c0_i32 = arith.constant 0 : i32
    %c0_i32_0 = arith.constant 0 : i32
    %c0_i32_1 = arith.constant 0 : i32
    return %c0_i32, %c0_i32_0 : i32, i32
  }
  func.func @transform_1(%arg0: i32) -> (i32, i32) {
    %c0_i32 = arith.constant 0 : i32
    %c0_i32_0 = arith.constant 0 : i32
    %c0_i32_1 = arith.constant 0 : i32
    return %c0_i32, %c0_i32_0 : i32, i32
  }
  func.func @transform_2(%arg0: i32) -> (i32, i32) {
    %c0_i32 = arith.constant 0 : i32
    %c0_i32_0 = arith.constant 0 : i32
    %c0_i32_1 = arith.constant 0 : i32
    return %c0_i32, %c0_i32_0 : i32, i32
  }
  func.func @transform_3(%arg0: i32) -> (i32, i32) {
    %c0_i32 = arith.constant 0 : i32
    %c0_i32_0 = arith.constant 0 : i32
    %c0_i32_1 = arith.constant 0 : i32
    return %c0_i32, %c0_i32_0 : i32, i32
  }
  func.func @transform_4(%arg0: i32) -> (i32, i32) {
    %c0_i32 = arith.constant 0 : i32
    %c0_i32_0 = arith.constant 0 : i32
    %c0_i32_1 = arith.constant 0 : i32
    return %c0_i32, %c0_i32_0 : i32, i32
  }
  func.func @transform_5(%arg0: i32) -> (i32, i32) {
    %c0_i32 = arith.constant 0 : i32
    %c0_i32_0 = arith.constant 0 : i32
    %c0_i32_1 = arith.constant 0 : i32
    return %c0_i32, %c0_i32_0 : i32, i32
  }
  func.func @transform_6(%arg0: i32) -> (i32, i32) {
    %c0_i32 = arith.constant 0 : i32
    %c0_i32_0 = arith.constant 0 : i32
    %c0_i32_1 = arith.constant 0 : i32
    return %c0_i32, %c0_i32_0 : i32, i32
  }
  func.func @transform_7(%arg0: i32) -> (i32, i32) {
    %c0_i32 = arith.constant 0 : i32
    %c0_i32_0 = arith.constant 0 : i32
    %c0_i32_1 = arith.constant 0 : i32
    return %c0_i32, %c0_i32_0 : i32, i32
  }
  func.func @transform_8(%arg0: i32) -> (i32, i32) {
    %c0_i32 = arith.constant 0 : i32
    %c0_i32_0 = arith.constant 0 : i32
    %c0_i32_1 = arith.constant 0 : i32
    return %c0_i32, %c0_i32_0 : i32, i32
  }
  func.func @transform_9(%arg0: i32) -> (i32, i32) {
    %c0_i32 = arith.constant 0 : i32
    %c0_i32_0 = arith.constant 0 : i32
    %c0_i32_1 = arith.constant 0 : i32
    return %c0_i32, %c0_i32_0 : i32, i32
  }
  func.func @transform_10(%arg0: i32) -> (i32, i32) {
    %c0_i32 = arith.constant 0 : i32
    %c0_i32_0 = arith.constant 0 : i32
    %c0_i32_1 = arith.constant 0 : i32
    return %c0_i32, %c0_i32_0 : i32, i32
  }
  func.func @transform_11(%arg0: i32) -> (i32, i32) {
    %c0_i32 = arith.constant 0 : i32
    %c0_i32_0 = arith.constant 0 : i32
    %c0_i32_1 = arith.constant 0 : i32
    return %c0_i32, %c0_i32_0 : i32, i32
  }
  func.func @transform_12(%arg0: i32) -> (i32, i32) {
    %c0_i32 = arith.constant 0 : i32
    %c0_i32_0 = arith.constant 0 : i32
    %c0_i32_1 = arith.constant 0 : i32
    return %c0_i32, %c0_i32_0 : i32, i32
  }
  func.func @transform_13(%arg0: i32) -> (i32, i32) {
    %c0_i32 = arith.constant 0 : i32
    %c0_i32_0 = arith.constant 0 : i32
    return %arg0, %c0_i32 : i32, i32
  }
}

</mosaic_0001>

<llo_original>
// kernel: tpu_custom_call.1
$region0: #{tpu_custom_call.1}
  #allocation0 [shape = 'u32[]', space=smem, size = 0x4, offset = 0x4, fixed_abs, tag = 'smem constant byte address 0x4 - core index']
  #allocation1 [shape = 'u32[144,128]{1,0:T(1,128)}', space=vmem, size = 0x12000, scoped, tag = 'internal scratch']
  %s0 = inlined_call_operand.vmem [shape: bf16[64,16], index: 0, kind: input, shape index: {}]
  %s1 = inlined_call_operand.vmem [shape: bf16[64,16], index: 1, kind: input, shape index: {}]
  %s2 = inlined_call_operand.vmem [shape: bf16[64,16], index: 2, kind: input, shape index: {}]
  %s3 = inlined_call_operand.hbm [shape: bf16[16,128], index: 3, kind: input, shape index: {}]
  %s4 = inlined_call_operand.vmem [shape: f32[1,128], index: 4, kind: input, shape index: {}]
  %s5 = inlined_call_operand.vmem [shape: bf16[16,256], index: 5, kind: input, shape index: {}]
  %s6 = inlined_call_operand.vmem [shape: f32[1,256], index: 6, kind: input, shape index: {}]
  %s7 = inlined_call_operand.vmem [shape: bf16[16,256], index: 7, kind: input, shape index: {}]
  %s8 = inlined_call_operand.vmem [shape: f32[1,256], index: 8, kind: input, shape index: {}]
  %s9 = inlined_call_operand.vmem [shape: bf16[16,256], index: 9, kind: input, shape index: {}]
  %s10 = inlined_call_operand.vmem [shape: f32[1,256], index: 10, kind: input, shape index: {}]
  %s11 = inlined_call_operand.vmem [shape: bf16[128,128], index: 11, kind: input, shape index: {}]
  %s12 = inlined_call_operand.vmem [shape: f32[1,128], index: 12, kind: input, shape index: {}]
  %s13 = inlined_call_operand.hbm [shape: f32[64,128], index: 13, kind: output, shape index: {}]
  %s14 = sld [smem:[#allocation0]]
  $region89: #{tpu_custom_call.1} parent=0
    _
  %s16 = ssub.s32 1, %s14
  %s17 = scalar_select 0, %s16, %s14
  $region1: #{tpu_custom_call.1} parent=0
    #allocation2 [shape = 'u8[4096]{0}', space=vmem, size = 0x1000, scoped, tag = 'input window, operand 3, single buffered']
    #allocation3 [shape = 's32[2]{0}', space=sflag, size = 0x8, scoped, tag = 'scoped memory for tpu_custom_call.1']
    #allocation4 [shape = 's32[2]{0}', space=sflag, size = 0x8, scoped, tag = 'scoped memory for tpu_custom_call.1']
    #allocation5 [shape = 'u8[32768]{0}', space=vmem, size = 0x8000, scoped, tag = 'output window, operand 0']
    %18 = vsyncpa [#allocation3], 0
    %19 = vsyncpa [#allocation4], 0
    %s20 = scalar_lea.sflag [#allocation4], 1
    %21 = vsyncpa %s20, 0
    loop: start=0, step=1, limit=4
    $region2: #{tpu_custom_call.1} parent=1 // loop_pre_header
      _
    $region3: #{tpu_custom_call.1} parent=1 // loop_header
      %s23 = sphi 0, %s27
      %p24 = scmp.ge.s32.totalorder %s23, 4
      %s31 = sphi 0, %s31
      %s33 = sphi 0, %s31
      %s34 = sphi 0, %s33
      %s48 = sphi 0, %s34
      %s52 = sphi 0, %s52
      %s54 = sphi 0, %s52
      %s55 = sphi 0, %s54
      %s69 = sphi 0, %s55
      %s73 = sphi 0, %s73
      %s75 = sphi 0, %s73
      %s76 = sphi 0, %s75
      %s90 = sphi 0, %s76
      %s94 = sphi 0, %s94
      %s96 = sphi 0, %s94
      %s97 = sphi 0, %s96
      %s111 = sphi 0, %s97
      %s115 = sphi 0, %s115
      %s117 = sphi 0, %s115
      %s118 = sphi 0, %s117
      %s132 = sphi 0, %s118
      %s136 = sphi 0, %s136
      %s138 = sphi 0, %s136
      %s139 = sphi 0, %s138
      %s153 = sphi 0, %s139
      %s157 = sphi 0, %s157
      %s159 = sphi 0, %s157
      %s160 = sphi 0, %s159
      %s174 = sphi 0, %s160
      %s178 = sphi 0, %s178
      %s180 = sphi 0, %s178
      %s181 = sphi 0, %s180
      %s195 = sphi 0, %s181
      %s199 = sphi 0, %s199
      %s201 = sphi 0, %s199
      %s202 = sphi 0, %s201
      %s216 = sphi 0, %s202
      %s220 = sphi 0, %s220
      %s222 = sphi 0, %s220
      %s223 = sphi 0, %s222
      %s237 = sphi 0, %s223
      %s241 = sphi 0, %s241
      %s243 = sphi 0, %s241
      %s244 = sphi 0, %s243
      %s258 = sphi 0, %s244
      %s262 = sphi 0, %s262
      %s264 = sphi 0, %s262
      %s265 = sphi 0, %s264
      %s279 = sphi 0, %s265
      %s283 = sphi 0, %s283
      %s285 = sphi 0, %s283
      %s286 = sphi 0, %s285
      %s300 = sphi 0, %s286
      %s306 = sphi 0, %s308
      %s309 = sphi 0, %s306
      %s310 = sphi 0, %s309
      %s326 = sphi 0, %s310
    $region4: #{tpu_custom_call.1} parent=1 // loop_header_branch
      %26 = sbr.rel (%p24) target = $region8
    $region5: #{tpu_custom_call.1} parent=1 // loop_body
      %s28 = ssub.s32 %s23, 1
      %s29 = ssub.s32 %s23, 2
      %s30 = sadd.s32 %s23, 1
      %s32 = sadd.s32 %s31, 1
      %p35 = scmp.eq.s32.totalorder %s23, 1
      %p36 = scmp.ne.s32.totalorder %s31, %s33
      %p37 = scmp.eq.s32.totalorder %s23, 0
      %p38 = por %p36, %p37
      %p39 = scmp.ne.s32.totalorder %s31, %s33
      %p40 = scmp.eq.s32.totalorder %s28, 1
      %p41 = por %p39, %p40
      %p42 = scmp.ne.s32.totalorder %s33, %s34
      %p43 = scmp.eq.s32.totalorder %s28, 0
      %p44 = por %p42, %p43
      %p45 = scmp.ne.s32.totalorder %s33, %s34
      %p46 = scmp.eq.s32.totalorder %s29, 1
      %p47 = por %p45, %p46
      %p49 = scmp.ne.s32.totalorder %s34, %s48
      %p50 = scmp.eq.s32.totalorder %s29, 0
      %p51 = por %p49, %p50
      %s53 = sadd.s32 %s52, 1
      %p56 = scmp.eq.s32.totalorder %s23, 1
      %p57 = scmp.ne.s32.totalorder %s52, %s54
      %p58 = scmp.eq.s32.totalorder %s23, 0
      %p59 = por %p57, %p58
      %p60 = scmp.ne.s32.totalorder %s52, %s54
      %p61 = scmp.eq.s32.totalorder %s28, 1
      %p62 = por %p60, %p61
      %p63 = scmp.ne.s32.totalorder %s54, %s55
      %p64 = scmp.eq.s32.totalorder %s28, 0
      %p65 = por %p63, %p64
      %p66 = scmp.ne.s32.totalorder %s54, %s55
      %p67 = scmp.eq.s32.totalorder %s29, 1
      %p68 = por %p66, %p67
      %p70 = scmp.ne.s32.totalorder %s55, %s69
      %p71 = scmp.eq.s32.totalorder %s29, 0
      %p72 = por %p70, %p71
      %s74 = sadd.s32 %s73, 1
      %p77 = scmp.eq.s32.totalorder %s23, 1
      %p78 = scmp.ne.s32.totalorder %s73, %s75
      %p79 = scmp.eq.s32.totalorder %s23, 0
      %p80 = por %p78, %p79
      %p81 = scmp.ne.s32.totalorder %s73, %s75
      %p82 = scmp.eq.s32.totalorder %s28, 1
      %p83 = por %p81, %p82
      %p84 = scmp.ne.s32.totalorder %s75, %s76
      %p85 = scmp.eq.s32.totalorder %s28, 0
      %p86 = por %p84, %p85
      %p87 = scmp.ne.s32.totalorder %s75, %s76
      %p88 = scmp.eq.s32.totalorder %s29, 1
      %p89 = por %p87, %p88
      %p91 = scmp.ne.s32.totalorder %s76, %s90
      %p92 = scmp.eq.s32.totalorder %s29, 0
      %p93 = por %p91, %p92
      %s95 = sadd.s32 %s94, 1
      %p98 = scmp.eq.s32.totalorder %s23, 1
      %p99 = scmp.ne.s32.totalorder %s94, %s96
      %p100 = scmp.eq.s32.totalorder %s23, 0
      %p101 = por %p99, %p100
      %p102 = scmp.ne.s32.totalorder %s94, %s96
      %p103 = scmp.eq.s32.totalorder %s28, 1
      %p104 = por %p102, %p103
      %p105 = scmp.ne.s32.totalorder %s96, %s97
      %p106 = scmp.eq.s32.totalorder %s28, 0
      %p107 = por %p105, %p106
      %p108 = scmp.ne.s32.totalorder %s96, %s97
      %p109 = scmp.eq.s32.totalorder %s29, 1
      %p110 = por %p108, %p109
      %p112 = scmp.ne.s32.totalorder %s97, %s111
      %p113 = scmp.eq.s32.totalorder %s29, 0
      %p114 = por %p112, %p113
      %s116 = sadd.s32 %s115, 1
      %p119 = scmp.eq.s32.totalorder %s23, 1
      %p120 = scmp.ne.s32.totalorder %s115, %s117
      %p121 = scmp.eq.s32.totalorder %s23, 0
      %p122 = por %p120, %p121
      %p123 = scmp.ne.s32.totalorder %s115, %s117
      %p124 = scmp.eq.s32.totalorder %s28, 1
      %p125 = por %p123, %p124
      %p126 = scmp.ne.s32.totalorder %s117, %s118
      %p127 = scmp.eq.s32.totalorder %s28, 0
      %p128 = por %p126, %p127
      %p129 = scmp.ne.s32.totalorder %s117, %s118
      %p130 = scmp.eq.s32.totalorder %s29, 1
      %p131 = por %p129, %p130
      %p133 = scmp.ne.s32.totalorder %s118, %s132
      %p134 = scmp.eq.s32.totalorder %s29, 0
      %p135 = por %p133, %p134
      %s137 = sadd.s32 %s136, 1
      %p140 = scmp.eq.s32.totalorder %s23, 1
      %p141 = scmp.ne.s32.totalorder %s136, %s138
      %p142 = scmp.eq.s32.totalorder %s23, 0
      %p143 = por %p141, %p142
      %p144 = scmp.ne.s32.totalorder %s136, %s138
      %p145 = scmp.eq.s32.totalorder %s28, 1
      %p146 = por %p144, %p145
      %p147 = scmp.ne.s32.totalorder %s138, %s139
      %p148 = scmp.eq.s32.totalorder %s28, 0
      %p149 = por %p147, %p148
      %p150 = scmp.ne.s32.totalorder %s138, %s139
      %p151 = scmp.eq.s32.totalorder %s29, 1
      %p152 = por %p150, %p151
      %p154 = scmp.ne.s32.totalorder %s139, %s153
      %p155 = scmp.eq.s32.totalorder %s29, 0
      %p156 = por %p154, %p155
      %s158 = sadd.s32 %s157, 1
      %p161 = scmp.eq.s32.totalorder %s23, 1
      %p162 = scmp.ne.s32.totalorder %s157, %s159
      %p163 = scmp.eq.s32.totalorder %s23, 0
      %p164 = por %p162, %p163
      %p165 = scmp.ne.s32.totalorder %s157, %s159
      %p166 = scmp.eq.s32.totalorder %s28, 1
      %p167 = por %p165, %p166
      %p168 = scmp.ne.s32.totalorder %s159, %s160
      %p169 = scmp.eq.s32.totalorder %s28, 0
      %p170 = por %p168, %p169
      %p171 = scmp.ne.s32.totalorder %s159, %s160
      %p172 = scmp.eq.s32.totalorder %s29, 1
      %p173 = por %p171, %p172
      %p175 = scmp.ne.s32.totalorder %s160, %s174
      %p176 = scmp.eq.s32.totalorder %s29, 0
      %p177 = por %p175, %p176
      %s179 = sadd.s32 %s178, 1
      %p182 = scmp.eq.s32.totalorder %s23, 1
      %p183 = scmp.ne.s32.totalorder %s178, %s180
      %p184 = scmp.eq.s32.totalorder %s23, 0
      %p185 = por %p183, %p184
      %p186 = scmp.ne.s32.totalorder %s178, %s180
      %p187 = scmp.eq.s32.totalorder %s28, 1
      %p188 = por %p186, %p187
      %p189 = scmp.ne.s32.totalorder %s180, %s181
      %p190 = scmp.eq.s32.totalorder %s28, 0
      %p191 = por %p189, %p190
      %p192 = scmp.ne.s32.totalorder %s180, %s181
      %p193 = scmp.eq.s32.totalorder %s29, 1
      %p194 = por %p192, %p193
      %p196 = scmp.ne.s32.totalorder %s181, %s195
      %p197 = scmp.eq.s32.totalorder %s29, 0
      %p198 = por %p196, %p197
      %s200 = sadd.s32 %s199, 1
      %p203 = scmp.eq.s32.totalorder %s23, 1
      %p204 = scmp.ne.s32.totalorder %s199, %s201
      %p205 = scmp.eq.s32.totalorder %s23, 0
      %p206 = por %p204, %p205
      %p207 = scmp.ne.s32.totalorder %s199, %s201
      %p208 = scmp.eq.s32.totalorder %s28, 1
      %p209 = por %p207, %p208
      %p210 = scmp.ne.s32.totalorder %s201, %s202
      %p211 = scmp.eq.s32.totalorder %s28, 0
      %p212 = por %p210, %p211
      %p213 = scmp.ne.s32.totalorder %s201, %s202
      %p214 = scmp.eq.s32.totalorder %s29, 1
      %p215 = por %p213, %p214
      %p217 = scmp.ne.s32.totalorder %s202, %s216
      %p218 = scmp.eq.s32.totalorder %s29, 0
      %p219 = por %p217, %p218
      %s221 = sadd.s32 %s220, 1
      %p224 = scmp.eq.s32.totalorder %s23, 1
      %p225 = scmp.ne.s32.totalorder %s220, %s222
      %p226 = scmp.eq.s32.totalorder %s23, 0
      %p227 = por %p225, %p226
      %p228 = scmp.ne.s32.totalorder %s220, %s222
      %p229 = scmp.eq.s32.totalorder %s28, 1
      %p230 = por %p228, %p229
      %p231 = scmp.ne.s32.totalorder %s222, %s223
      %p232 = scmp.eq.s32.totalorder %s28, 0
      %p233 = por %p231, %p232
      %p234 = scmp.ne.s32.totalorder %s222, %s223
      %p235 = scmp.eq.s32.totalorder %s29, 1
      %p236 = por %p234, %p235
      %p238 = scmp.ne.s32.totalorder %s223, %s237
      %p239 = scmp.eq.s32.totalorder %s29, 0
      %p240 = por %p238, %p239
      %s242 = sadd.s32 %s241, 1
      %p245 = scmp.eq.s32.totalorder %s23, 1
      %p246 = scmp.ne.s32.totalorder %s241, %s243
      %p247 = scmp.eq.s32.totalorder %s23, 0
      %p248 = por %p246, %p247
      %p249 = scmp.ne.s32.totalorder %s241, %s243
      %p250 = scmp.eq.s32.totalorder %s28, 1
      %p251 = por %p249, %p250
      %p252 = scmp.ne.s32.totalorder %s243, %s244
      %p253 = scmp.eq.s32.totalorder %s28, 0
      %p254 = por %p252, %p253
      %p255 = scmp.ne.s32.totalorder %s243, %s244
      %p256 = scmp.eq.s32.totalorder %s29, 1
      %p257 = por %p255, %p256
      %p259 = scmp.ne.s32.totalorder %s244, %s258
      %p260 = scmp.eq.s32.totalorder %s29, 0
      %p261 = por %p259, %p260
      %s263 = sadd.s32 %s262, 1
      %p266 = scmp.eq.s32.totalorder %s23, 1
      %p267 = scmp.ne.s32.totalorder %s262, %s264
      %p268 = scmp.eq.s32.totalorder %s23, 0
      %p269 = por %p267, %p268
      %p270 = scmp.ne.s32.totalorder %s262, %s264
      %p271 = scmp.eq.s32.totalorder %s28, 1
      %p272 = por %p270, %p271
      %p273 = scmp.ne.s32.totalorder %s264, %s265
      %p274 = scmp.eq.s32.totalorder %s28, 0
      %p275 = por %p273, %p274
      %p276 = scmp.ne.s32.totalorder %s264, %s265
      %p277 = scmp.eq.s32.totalorder %s29, 1
      %p278 = por %p276, %p277
      %p280 = scmp.ne.s32.totalorder %s265, %s279
      %p281 = scmp.eq.s32.totalorder %s29, 0
      %p282 = por %p280, %p281
      %s284 = sadd.s32 %s283, 1
      %p287 = scmp.eq.s32.totalorder %s23, 1
      %p288 = scmp.ne.s32.totalorder %s283, %s285
      %p289 = scmp.eq.s32.totalorder %s23, 0
      %p290 = por %p288, %p289
      %p291 = scmp.ne.s32.totalorder %s283, %s285
      %p292 = scmp.eq.s32.totalorder %s28, 1
      %p293 = por %p291, %p292
      %p294 = scmp.ne.s32.totalorder %s285, %s286
      %p295 = scmp.eq.s32.totalorder %s28, 0
      %p296 = por %p294, %p295
      %p297 = scmp.ne.s32.totalorder %s285, %s286
      %p298 = scmp.eq.s32.totalorder %s29, 1
      %p299 = por %p297, %p298
      %p301 = scmp.ne.s32.totalorder %s286, %s300
      %p302 = scmp.eq.s32.totalorder %s29, 0
      %p303 = por %p301, %p302
      %s304 = ssub.s32 %s23, %s30
      %p305 = scmp.eq.s32.totalorder %s304, 0
      %s307 = sadd.s32 %s306, 1
      %s308 = scalar_select %p305, %s306, %s307
      %p311 = pneg %p305
      %p312 = scmp.eq.s32.totalorder %s23, 1
      %p313 = por %p311, %p312
      %p314 = scmp.ne.s32.totalorder %s306, %s309
      %p315 = scmp.eq.s32.totalorder %s23, 0
      %p316 = por %p314, %p315
      %p317 = scmp.ne.s32.totalorder %s306, %s309
      %p318 = scmp.eq.s32.totalorder %s28, 1
      %p319 = por %p317, %p318
      %p320 = scmp.ne.s32.totalorder %s309, %s310
      %p321 = scmp.eq.s32.totalorder %s28, 0
      %p322 = por %p320, %p321
      %p323 = scmp.ne.s32.totalorder %s309, %s310
      %p324 = scmp.eq.s32.totalorder %s29, 1
      %p325 = por %p323, %p324
      %p327 = scmp.ne.s32.totalorder %s310, %s326
      %p328 = scmp.eq.s32.totalorder %s29, 0
      %p329 = por %p327, %p328
      %p330 = scmp.le.s32.totalorder 1, %s23
      %p331 = scmp.lt.s32.totalorder %s23, 3
      %p332 = pnand %p330, %p331
      %p333 = pneg %p332
      // Predicated region
      $region9: #{tpu_custom_call.1} parent=5 // pred_check
        _
      $region10: #{tpu_custom_call.1} parent=5 // pred_check_branch
        %335 = sbr.rel (%p332) target = $region12
      $region11: #{tpu_custom_call.1} parent=5 // pred_region
        %s336 = ssub.s32 %s23, 1
        // Predicated region
        $region13: #{tpu_custom_call.1} parent=11 // pred_check
          %p337 = pneg %p44
        $region14: #{tpu_custom_call.1} parent=11 // pred_check_branch
          %339 = sbr.rel (%p337) target = $region16
        $region15: #{tpu_custom_call.1} parent=11 // pred_region
          _
        $region16: #{tpu_custom_call.1} parent=11 // pred_fallthru
          _
        // Predicated region
        $region17: #{tpu_custom_call.1} parent=11 // pred_check
          %p340 = pneg %p65
        $region18: #{tpu_custom_call.1} parent=11 // pred_check_branch
          %342 = sbr.rel (%p340) target = $region20
        $region19: #{tpu_custom_call.1} parent=11 // pred_region
          _
        $region20: #{tpu_custom_call.1} parent=11 // pred_fallthru
          _
        // Predicated region
        $region21: #{tpu_custom_call.1} parent=11 // pred_check
          %p343 = pneg %p86
        $region22: #{tpu_custom_call.1} parent=11 // pred_check_branch
          %345 = sbr.rel (%p343) target = $region24
        $region23: #{tpu_custom_call.1} parent=11 // pred_region
          _
        $region24: #{tpu_custom_call.1} parent=11 // pred_fallthru
          _
        // Predicated region
        $region25: #{tpu_custom_call.1} parent=11 // pred_check
          %p346 = pneg %p107
        $region26: #{tpu_custom_call.1} parent=11 // pred_check_branch
          %348 = sbr.rel (%p346) target = $region28
        $region27: #{tpu_custom_call.1} parent=11 // pred_region
          %s350 = ssub.s32 128, 128
          %351 = vsyncadd [#allocation3], %s350
          %s352 = sshll.u32 [#allocation2], 4
          %s353 = int_to_ptr.vmem [resolvable:$true] %s352
          %358 = dma.hbm_to_vmem [thread:$0]  %s3, 128, %s353, [#allocation3], 64, 64, 4
        $region28: #{tpu_custom_call.1} parent=11 // pred_fallthru
          _
        // Predicated region
        $region29: #{tpu_custom_call.1} parent=11 // pred_check
          %p359 = pneg %p128
        $region30: #{tpu_custom_call.1} parent=11 // pred_check_branch
          %361 = sbr.rel (%p359) target = $region32
        $region31: #{tpu_custom_call.1} parent=11 // pred_region
          _
        $region32: #{tpu_custom_call.1} parent=11 // pred_fallthru
          _
        // Predicated region
        $region33: #{tpu_custom_call.1} parent=11 // pred_check
          %p362 = pneg %p149
        $region34: #{tpu_custom_call.1} parent=11 // pred_check_branch
          %364 = sbr.rel (%p362) target = $region36
        $region35: #{tpu_custom_call.1} parent=11 // pred_region
          _
        $region36: #{tpu_custom_call.1} parent=11 // pred_fallthru
          _
        // Predicated region
        $region37: #{tpu_custom_call.1} parent=11 // pred_check
          %p365 = pneg %p170
        $region38: #{tpu_custom_call.1} parent=11 // pred_check_branch
          %367 = sbr.rel (%p365) target = $region40
        $region39: #{tpu_custom_call.1} parent=11 // pred_region
          _
        $region40: #{tpu_custom_call.1} parent=11 // pred_fallthru
          _
        // Predicated region
        $region41: #{tpu_custom_call.1} parent=11 // pred_check
          %p368 = pneg %p191
        $region42: #{tpu_custom_call.1} parent=11 // pred_check_branch
          %370 = sbr.rel (%p368) target = $region44
        $region43: #{tpu_custom_call.1} parent=11 // pred_region
          _
        $region44: #{tpu_custom_call.1} parent=11 // pred_fallthru
          _
        // Predicated region
        $region45: #{tpu_custom_call.1} parent=11 // pred_check
          %p371 = pneg %p212
        $region46: #{tpu_custom_call.1} parent=11 // pred_check_branch
          %373 = sbr.rel (%p371) target = $region48
        $region47: #{tpu_custom_call.1} parent=11 // pred_region
          _
        $region48: #{tpu_custom_call.1} parent=11 // pred_fallthru
          _
        // Predicated region
        $region49: #{tpu_custom_call.1} parent=11 // pred_check
          %p374 = pneg %p233
        $region50: #{tpu_custom_call.1} parent=11 // pred_check_branch
          %376 = sbr.rel (%p374) target = $region52
        $region51: #{tpu_custom_call.1} parent=11 // pred_region
          _
        $region52: #{tpu_custom_call.1} parent=11 // pred_fallthru
          _
        // Predicated region
        $region53: #{tpu_custom_call.1} parent=11 // pred_check
          %p377 = pneg %p254
        $region54: #{tpu_custom_call.1} parent=11 // pred_check_branch
          %379 = sbr.rel (%p377) target = $region56
        $region55: #{tpu_custom_call.1} parent=11 // pred_region
          _
        $region56: #{tpu_custom_call.1} parent=11 // pred_fallthru
          _
        // Predicated region
        $region57: #{tpu_custom_call.1} parent=11 // pred_check
          %p380 = pneg %p275
        $region58: #{tpu_custom_call.1} parent=11 // pred_check_branch
          %382 = sbr.rel (%p380) target = $region60
        $region59: #{tpu_custom_call.1} parent=11 // pred_region
          _
        $region60: #{tpu_custom_call.1} parent=11 // pred_fallthru
          _
        // Predicated region
        $region61: #{tpu_custom_call.1} parent=11 // pred_check
          %p383 = pneg %p296
        $region62: #{tpu_custom_call.1} parent=11 // pred_check_branch
          %385 = sbr.rel (%p383) target = $region64
        $region63: #{tpu_custom_call.1} parent=11 // pred_region
          _
        $region64: #{tpu_custom_call.1} parent=11 // pred_fallthru
          _
      $region12: #{tpu_custom_call.1} parent=5 // pred_fallthru
        _
      %p386 = scmp.lt.s32.totalorder %s23, 2
      // Predicated region
      $region65: #{tpu_custom_call.1} parent=5 // pred_check
        %p387 = pneg %p386
      $region66: #{tpu_custom_call.1} parent=5 // pred_check_branch
        %389 = sbr.rel (%p387) target = $region68
      $region67: #{tpu_custom_call.1} parent=5 // pred_region
        _
      $region68: #{tpu_custom_call.1} parent=5 // pred_fallthru
        _
      %p390 = scmp.le.s32.totalorder 1, %s23
      %p391 = scmp.lt.s32.totalorder %s23, 3
      %p392 = pnand %p390, %p391
      %p393 = pneg %p392
      // Predicated region
      $region69: #{tpu_custom_call.1} parent=5 // pred_check
        _
      $region70: #{tpu_custom_call.1} parent=5 // pred_check_branch
        %395 = sbr.rel (%p392) target = $region72
      $region71: #{tpu_custom_call.1} parent=5 // pred_region
        %s396 = ssub.s32 %s23, 1
        // Predicated region
        $region73: #{tpu_custom_call.1} parent=71 // pred_check
          %p397 = pneg %p107
        $region74: #{tpu_custom_call.1} parent=71 // pred_check_branch
          %399 = sbr.rel (%p397) target = $region76
        $region75: #{tpu_custom_call.1} parent=71 // pred_region
          %400 = dma.done [#allocation3], 128
        $region76: #{tpu_custom_call.1} parent=71 // pred_fallthru
          _
        %p401 = pneg %p44
        %p402 = pneg %p41
        %p403 = pneg %p65
        %p404 = pneg %p62
        %p405 = pneg %p86
        %p406 = pneg %p83
        %p407 = pneg %p107
        %p408 = pneg %p104
        %p409 = pneg %p128
        %p410 = pneg %p125
        %p411 = pneg %p149
        %p412 = pneg %p146
        %p413 = pneg %p170
        %p414 = pneg %p167
        %p415 = pneg %p191
        %p416 = pneg %p188
        %p417 = pneg %p212
        %p418 = pneg %p209
        %p419 = pneg %p233
        %p420 = pneg %p230
        %p421 = pneg %p254
        %p422 = pneg %p251
        %p423 = pneg %p275
        %p424 = pneg %p272
        %p425 = pneg %p296
        %p426 = pneg %p293
        %p427 = pneg %p322
        %p428 = pneg %p319
        %s429 = sand.u32 %s309, 1
        %s430 = scalar_lea.sflag [#allocation4], %s429
        %s431 = sand.u32 %s309, 1
        %s432 = smul.addr %s431, 32
        %s433 = scalar_lea.vmem [#allocation5], %s432
        %s434 = smul.u32 4, %s28
        %s436 = smul.u32 %s28, 32
        %s437 = sshra.s32 %s436, 3
        %s438 = sand.u32 %s436, 7
        %s439 = smul.addr %s437, 4
        %s440 = scalar_lea.vmem %s0, %s439
        %v441 = vld [vmem:[%s440] sm:$0xf]
        %v442 = vld [vmem:[%s440 + $0x4] sm:$0xf]
        %v443 = vld [vmem:[%s440 + $0x8] sm:$0xf]
        %v444 = vld [vmem:[%s440 + $0xc] sm:$0xf]
        %v445 = vld [vmem:[#allocation2] sm:$0xf]
        %v446 = vld [vmem:[#allocation2 + $0x4] sm:$0xf]
        %v447 = vld [vmem:[%s4] sm:$0x1]
        %v449 = vlaneseq
        %v450 = vshrl.u32 %v449, 7
        %v451 = vsub.s32 0, %v450
        %v452 = vrot.slane %v447, %v451
        %v458 = vunpack.c.l.b16 %v441
        %v459 = vunpack.c.l.b16 %v442
        %v460 = vunpack.c.l.b16 %v443
        %v461 = vunpack.c.l.b16 %v444
        %v462 = vpack.c.b16 %v459, %v458
        %v463 = vpack.c.b16 %v461, %v460
        %v466 = vunpack.c.l.b16 %v445
        %v467 = vunpack.c.l.b16 %v446
        %v468 = vpack.c.b16 %v467, %v466
        %vm470 = vcmask 130048
        %v472 = vsel %vm470, %v462, 0
        %v475 = vsel %vm470, %v463, 0
        %477 = vmatprep.subr.bf16.mxu0 0
        %478 = vmatpush1.bf16.msra.mxu0 0
        %479 = vmatprep.subr.bf16.mxu0 0
        %480 = vmatpush1.bf16.msra.mxu0 0
        %481 = vmatprep.subr.bf16.mxu0 0
        %482 = vmatpush1.bf16.msra.mxu0 0
        %483 = vmatprep.subr.bf16.mxu0 0
        %484 = vmatpush1.bf16.msra.mxu0 0
        %485 = vmatprep.subr.bf16.mxu0 0
        %486 = vmatpush1.bf16.msra.mxu0 0
        %487 = vmatprep.subr.bf16.mxu0 0
        %488 = vmatpush1.bf16.msra.mxu0 0
        %489 = vmatprep.subr.bf16.mxu0 0
        %490 = vmatpush1.bf16.msra.mxu0 0
        %491 = vmatprep.subr.bf16.mxu0 0
        %492 = vmatpush1.bf16.msra.mxu0 %v468
        %493 = vmatprep.subr.bf16.mxu0 0
        %494 = vmatpush2.bf16.msra.mxu0 0
        %495 = vmatprep.subr.bf16.mxu0 0
        %496 = vmatpush2.bf16.msra.mxu0 0
        %497 = vmatprep.subr.bf16.mxu0 0
        %498 = vmatpush2.bf16.msra.mxu0 0
        %499 = vmatprep.subr.bf16.mxu0 0
        %500 = vmatpush2.bf16.msra.mxu0 0
        %501 = vmatprep.subr.bf16.mxu0 0
        %502 = vmatpush2.bf16.msra.mxu0 0
        %503 = vmatprep.subr.bf16.mxu0 0
        %504 = vmatpush2.bf16.msra.mxu0 0
        %505 = vmatprep.subr.bf16.mxu0 0
        %506 = vmatpush2.bf16.msra.mxu0 0
        %507 = vmatprep.subr.bf16.mxu0 0
        %508 = vmatpush2.bf16.msra.mxu0 0
        %509 = vmatprep.mubr.bf16.mxu0 0
        %510 = vmatmul.mubr.bf16.gmra.mxu0 %v472
        %v511 = vpop.f32.mrf.mxu0
        %v512 = vadd.f32 %v452, %v511
        %v513 = vpop.f32.mrf.mxu0
        %v514 = vpop.f32.mrf.mxu0
        %v515 = vadd.f32 %v452, %v514
        %v516 = vpop.f32.mrf.mxu0
        %517 = vmatprep.mubr.bf16.mxu0 0
        %518 = vmatmul.mubr.bf16.gmra.mxu0 %v475
        %v519 = vpop.f32.mrf.mxu0
        %v520 = vadd.f32 %v452, %v519
        %v521 = vpop.f32.mrf.mxu0
        %v522 = vpop.f32.mrf.mxu0
        %v523 = vadd.f32 %v452, %v522
        %v524 = vpop.f32.mrf.mxu0
        %525 = vdwg.mxu0
        %v526 = vpack.c.bf16 %v515, %v512
        %v527 = vpack.c.bf16 %v523, %v520
        %v528 = vld [vmem:[%s0] sm:$0xf]
        %v529 = vld [vmem:[%s0 + $0x4] sm:$0xf]
        %v530 = vld [vmem:[%s0 + $0x8] sm:$0xf]
        %v531 = vld [vmem:[%s0 + $0xc] sm:$0xf]
        %v532 = vld [vmem:[%s0 + $0x10] sm:$0xf]
        %v533 = vld [vmem:[%s0 + $0x14] sm:$0xf]
        %v534 = vld [vmem:[%s0 + $0x18] sm:$0xf]
        %v535 = vld [vmem:[%s0 + $0x1c] sm:$0xf]
        %v536 = vld [vmem:[%s5] sm:$0xff]
        %v537 = vld [vmem:[%s5 + $0x8] sm:$0xff]
        %v538 = vld [vmem:[%s6] sm:$0x3]
        %v540 = vlaneseq
        %v541 = vshrl.u32 %v540, 7
        %v542 = vsub.s32 0, %v541
        %v543 = vrot.slane %v538, %v542
        %v544 = vlaneseq
        %v545 = vshrl.u32 %v544, 7
        %v546 = vsub.s32 1, %v545
        %v547 = vrot.slane %v538, %v546
        %v558 = vunpack.c.l.b16 %v528
        %v559 = vunpack.c.l.b16 %v529
        %v560 = vunpack.c.l.b16 %v530
        %v561 = vunpack.c.l.b16 %v531
        %v562 = vunpack.c.l.b16 %v532
        %v563 = vunpack.c.l.b16 %v533
        %v564 = vunpack.c.l.b16 %v534
        %v565 = vunpack.c.l.b16 %v535
        %v566 = vpack.c.b16 %v559, %v558
        %v567 = vpack.c.b16 %v561, %v560
        %v568 = vpack.c.b16 %v563, %v562
        %v569 = vpack.c.b16 %v565, %v564
        %v572 = vunpack.c.l.b16 %v536
        %v573 = vunpack.c.h.b16 %v536
        %v574 = vunpack.c.l.b16 %v537
        %v575 = vunpack.c.h.b16 %v537
        %v576 = vpack.c.b16 %v574, %v572
        %v577 = vpack.c.b16 %v575, %v573
        %v581 = vsel %vm470, %v566, 0
        %v584 = vsel %vm470, %v567, 0
        %v587 = vsel %vm470, %v568, 0
        %v590 = vsel %vm470, %v569, 0
        %592 = vmatprep.subr.bf16.mxu0 0
        %593 = vmatpush1.bf16.msra.mxu0 0
        %594 = vmatprep.subr.bf16.mxu0 0
        %595 = vmatpush1.bf16.msra.mxu0 0
        %596 = vmatprep.subr.bf16.mxu0 0
        %597 = vmatpush1.bf16.msra.mxu0 0
        %598 = vmatprep.subr.bf16.mxu0 0
        %599 = vmatpush1.bf16.msra.mxu0 0
        %600 = vmatprep.subr.bf16.mxu0 0
        %601 = vmatpush1.bf16.msra.mxu0 0
        %602 = vmatprep.subr.bf16.mxu0 0
        %603 = vmatpush1.bf16.msra.mxu0 0
        %604 = vmatprep.subr.bf16.mxu0 0
        %605 = vmatpush1.bf16.msra.mxu0 0
        %606 = vmatprep.subr.bf16.mxu0 %v577
        %607 = vmatpush1.bf16.msra.mxu0 %v576
        %608 = vmatprep.subr.bf16.mxu0 0
        %609 = vmatpush2.bf16.msra.mxu0 0
        %610 = vmatprep.subr.bf16.mxu0 0
        %611 = vmatpush2.bf16.msra.mxu0 0
        %612 = vmatprep.subr.bf16.mxu0 0
        %613 = vmatpush2.bf16.msra.mxu0 0
        %614 = vmatprep.subr.bf16.mxu0 0
        %615 = vmatpush2.bf16.msra.mxu0 0
        %616 = vmatprep.subr.bf16.mxu0 0
        %617 = vmatpush2.bf16.msra.mxu0 0
        %618 = vmatprep.subr.bf16.mxu0 0
        %619 = vmatpush2.bf16.msra.mxu0 0
        %620 = vmatprep.subr.bf16.mxu0 0
        %621 = vmatpush2.bf16.msra.mxu0 0
        %622 = vmatprep.subr.bf16.mxu0 0
        %623 = vmatpush2.bf16.msra.mxu0 0
        %624 = vmatprep.mubr.bf16.mxu0 0
        %625 = vmatmul.mubr.bf16.gmra.mxu0 %v581
        %v626 = vpop.f32.mrf.mxu0
        %v627 = vadd.f32 %v543, %v626
        %v628 = vpop.f32.mrf.mxu0
        %v629 = vadd.f32 %v547, %v628
        %v630 = vpop.f32.mrf.mxu0
        %v631 = vadd.f32 %v543, %v630
        %v632 = vpop.f32.mrf.mxu0
        %v633 = vadd.f32 %v547, %v632
        %634 = vmatprep.mubr.bf16.mxu0 0
        %635 = vmatmul.mubr.bf16.gmra.mxu0 %v584
        %v636 = vpop.f32.mrf.mxu0
        %v637 = vadd.f32 %v543, %v636
        %v638 = vpop.f32.mrf.mxu0
        %v639 = vadd.f32 %v547, %v638
        %v640 = vpop.f32.mrf.mxu0
        %v641 = vadd.f32 %v543, %v640
        %v642 = vpop.f32.mrf.mxu0
        %v643 = vadd.f32 %v547, %v642
        %644 = vmatprep.mubr.bf16.mxu0 0
        %645 = vmatmul.mubr.bf16.gmra.mxu0 %v587
        %v646 = vpop.f32.mrf.mxu0
        %v647 = vadd.f32 %v543, %v646
        %v648 = vpop.f32.mrf.mxu0
        %v649 = vadd.f32 %v547, %v648
        %v650 = vpop.f32.mrf.mxu0
        %v651 = vadd.f32 %v543, %v650
        %v652 = vpop.f32.mrf.mxu0
        %v653 = vadd.f32 %v547, %v652
        %654 = vmatprep.mubr.bf16.mxu0 0
        %655 = vmatmul.mubr.bf16.gmra.mxu0 %v590
        %v656 = vpop.f32.mrf.mxu0
        %v657 = vadd.f32 %v543, %v656
        %v658 = vpop.f32.mrf.mxu0
        %v659 = vadd.f32 %v547, %v658
        %v660 = vpop.f32.mrf.mxu0
        %v661 = vadd.f32 %v543, %v660
        %v662 = vpop.f32.mrf.mxu0
        %v663 = vadd.f32 %v547, %v662
        %664 = vdwg.mxu0
        %v665 = vld [vmem:[%s1] sm:$0xf]
        %v666 = vld [vmem:[%s1 + $0x4] sm:$0xf]
        %v667 = vld [vmem:[%s1 + $0x8] sm:$0xf]
        %v668 = vld [vmem:[%s1 + $0xc] sm:$0xf]
        %v669 = vld [vmem:[%s1 + $0x10] sm:$0xf]
        %v670 = vld [vmem:[%s1 + $0x14] sm:$0xf]
        %v671 = vld [vmem:[%s1 + $0x18] sm:$0xf]
        %v672 = vld [vmem:[%s1 + $0x1c] sm:$0xf]
        %v673 = vld [vmem:[%s7] sm:$0xff]
        %v674 = vld [vmem:[%s7 + $0x8] sm:$0xff]
        %v675 = vld [vmem:[%s8] sm:$0x3]
        %v677 = vlaneseq
        %v678 = vshrl.u32 %v677, 7
        %v679 = vsub.s32 0, %v678
        %v680 = vrot.slane %v675, %v679
        %v681 = vlaneseq
        %v682 = vshrl.u32 %v681, 7
        %v683 = vsub.s32 1, %v682
        %v684 = vrot.slane %v675, %v683
        %v695 = vunpack.c.l.b16 %v665
        %v696 = vunpack.c.l.b16 %v666
        %v697 = vunpack.c.l.b16 %v667
        %v698 = vunpack.c.l.b16 %v668
        %v699 = vunpack.c.l.b16 %v669
        %v700 = vunpack.c.l.b16 %v670
        %v701 = vunpack.c.l.b16 %v671
        %v702 = vunpack.c.l.b16 %v672
        %v703 = vpack.c.b16 %v696, %v695
        %v704 = vpack.c.b16 %v698, %v697
        %v705 = vpack.c.b16 %v700, %v699
        %v706 = vpack.c.b16 %v702, %v701
        %v709 = vunpack.c.l.b16 %v673
        %v710 = vunpack.c.h.b16 %v673
        %v711 = vunpack.c.l.b16 %v674
        %v712 = vunpack.c.h.b16 %v674
        %v713 = vpack.c.b16 %v711, %v709
        %v714 = vpack.c.b16 %v712, %v710
        %v718 = vsel %vm470, %v703, 0
        %v721 = vsel %vm470, %v704, 0
        %v724 = vsel %vm470, %v705, 0
        %v727 = vsel %vm470, %v706, 0
        %729 = vmatprep.subr.bf16.mxu0 0
        %730 = vmatpush1.bf16.msra.mxu0 0
        %731 = vmatprep.subr.bf16.mxu0 0
        %732 = vmatpush1.bf16.msra.mxu0 0
        %733 = vmatprep.subr.bf16.mxu0 0
        %734 = vmatpush1.bf16.msra.mxu0 0
        %735 = vmatprep.subr.bf16.mxu0 0
        %736 = vmatpush1.bf16.msra.mxu0 0
        %737 = vmatprep.subr.bf16.mxu0 0
        %738 = vmatpush1.bf16.msra.mxu0 0
        %739 = vmatprep.subr.bf16.mxu0 0
        %740 = vmatpush1.bf16.msra.mxu0 0
        %741 = vmatprep.subr.bf16.mxu0 0
        %742 = vmatpush1.bf16.msra.mxu0 0
        %743 = vmatprep.subr.bf16.mxu0 %v714
        %744 = vmatpush1.bf16.msra.mxu0 %v713
        %745 = vmatprep.subr.bf16.mxu0 0
        %746 = vmatpush2.bf16.msra.mxu0 0
        %747 = vmatprep.subr.bf16.mxu0 0
        %748 = vmatpush2.bf16.msra.mxu0 0
        %749 = vmatprep.subr.bf16.mxu0 0
        %750 = vmatpush2.bf16.msra.mxu0 0
        %751 = vmatprep.subr.bf16.mxu0 0
        %752 = vmatpush2.bf16.msra.mxu0 0
        %753 = vmatprep.subr.bf16.mxu0 0
        %754 = vmatpush2.bf16.msra.mxu0 0
        %755 = vmatprep.subr.bf16.mxu0 0
        %756 = vmatpush2.bf16.msra.mxu0 0
        %757 = vmatprep.subr.bf16.mxu0 0
        %758 = vmatpush2.bf16.msra.mxu0 0
        %759 = vmatprep.subr.bf16.mxu0 0
        %760 = vmatpush2.bf16.msra.mxu0 0
        %761 = vmatprep.mubr.bf16.mxu0 0
        %762 = vmatmul.mubr.bf16.gmra.mxu0 %v718
        %v763 = vpop.f32.mrf.mxu0
        %v764 = vadd.f32 %v680, %v763
        %v765 = vpop.f32.mrf.mxu0
        %v766 = vadd.f32 %v684, %v765
        %v767 = vpop.f32.mrf.mxu0
        %v768 = vadd.f32 %v680, %v767
        %v769 = vpop.f32.mrf.mxu0
        %v770 = vadd.f32 %v684, %v769
        %771 = vmatprep.mubr.bf16.mxu0 0
        %772 = vmatmul.mubr.bf16.gmra.mxu0 %v721
        %v773 = vpop.f32.mrf.mxu0
        %v774 = vadd.f32 %v680, %v773
        %v775 = vpop.f32.mrf.mxu0
        %v776 = vadd.f32 %v684, %v775
        %v777 = vpop.f32.mrf.mxu0
        %v778 = vadd.f32 %v680, %v777
        %v779 = vpop.f32.mrf.mxu0
        %v780 = vadd.f32 %v684, %v779
        %781 = vmatprep.mubr.bf16.mxu0 0
        %782 = vmatmul.mubr.bf16.gmra.mxu0 %v724
        %v783 = vpop.f32.mrf.mxu0
        %v784 = vadd.f32 %v680, %v783
        %v785 = vpop.f32.mrf.mxu0
        %v786 = vadd.f32 %v684, %v785
        %v787 = vpop.f32.mrf.mxu0
        %v788 = vadd.f32 %v680, %v787
        %v789 = vpop.f32.mrf.mxu0
        %v790 = vadd.f32 %v684, %v789
        %791 = vmatprep.mubr.bf16.mxu0 0
        %792 = vmatmul.mubr.bf16.gmra.mxu0 %v727
        %v793 = vpop.f32.mrf.mxu0
        %v794 = vadd.f32 %v680, %v793
        %v795 = vpop.f32.mrf.mxu0
        %v796 = vadd.f32 %v684, %v795
        %v797 = vpop.f32.mrf.mxu0
        %v798 = vadd.f32 %v680, %v797
        %v799 = vpop.f32.mrf.mxu0
        %v800 = vadd.f32 %v684, %v799
        %801 = vdwg.mxu0
        %v802 = vld [vmem:[%s2] sm:$0xf]
        %v803 = vld [vmem:[%s2 + $0x4] sm:$0xf]
        %v804 = vld [vmem:[%s2 + $0x8] sm:$0xf]
        %v805 = vld [vmem:[%s2 + $0xc] sm:$0xf]
        %v806 = vld [vmem:[%s2 + $0x10] sm:$0xf]
        %v807 = vld [vmem:[%s2 + $0x14] sm:$0xf]
        %v808 = vld [vmem:[%s2 + $0x18] sm:$0xf]
        %v809 = vld [vmem:[%s2 + $0x1c] sm:$0xf]
        %v810 = vld [vmem:[%s9] sm:$0xff]
        %v811 = vld [vmem:[%s9 + $0x8] sm:$0xff]
        %v812 = vld [vmem:[%s10] sm:$0x3]
        %v814 = vlaneseq
        %v815 = vshrl.u32 %v814, 7
        %v816 = vsub.s32 0, %v815
        %v817 = vrot.slane %v812, %v816
        %v818 = vlaneseq
        %v819 = vshrl.u32 %v818, 7
        %v820 = vsub.s32 1, %v819
        %v821 = vrot.slane %v812, %v820
        %v832 = vunpack.c.l.b16 %v802
        %v833 = vunpack.c.l.b16 %v803
        %v834 = vunpack.c.l.b16 %v804
        %v835 = vunpack.c.l.b16 %v805
        %v836 = vunpack.c.l.b16 %v806
        %v837 = vunpack.c.l.b16 %v807
        %v838 = vunpack.c.l.b16 %v808
        %v839 = vunpack.c.l.b16 %v809
        %v840 = vpack.c.b16 %v833, %v832
        %v841 = vpack.c.b16 %v835, %v834
        %v842 = vpack.c.b16 %v837, %v836
        %v843 = vpack.c.b16 %v839, %v838
        %v846 = vunpack.c.l.b16 %v810
        %v847 = vunpack.c.h.b16 %v810
        %v848 = vunpack.c.l.b16 %v811
        %v849 = vunpack.c.h.b16 %v811
        %v850 = vpack.c.b16 %v848, %v846
        %v851 = vpack.c.b16 %v849, %v847
        %v855 = vsel %vm470, %v840, 0
        %v858 = vsel %vm470, %v841, 0
        %v861 = vsel %vm470, %v842, 0
        %v864 = vsel %vm470, %v843, 0
        %866 = vmatprep.subr.bf16.mxu0 0
        %867 = vmatpush1.bf16.msra.mxu0 0
        %868 = vmatprep.subr.bf16.mxu0 0
        %869 = vmatpush1.bf16.msra.mxu0 0
        %870 = vmatprep.subr.bf16.mxu0 0
        %871 = vmatpush1.bf16.msra.mxu0 0
        %872 = vmatprep.subr.bf16.mxu0 0
        %873 = vmatpush1.bf16.msra.mxu0 0
        %874 = vmatprep.subr.bf16.mxu0 0
        %875 = vmatpush1.bf16.msra.mxu0 0
        %876 = vmatprep.subr.bf16.mxu0 0
        %877 = vmatpush1.bf16.msra.mxu0 0
        %878 = vmatprep.subr.bf16.mxu0 0
        %879 = vmatpush1.bf16.msra.mxu0 0
        %880 = vmatprep.subr.bf16.mxu0 %v851
        %881 = vmatpush1.bf16.msra.mxu0 %v850
        %882 = vmatprep.subr.bf16.mxu0 0
        %883 = vmatpush2.bf16.msra.mxu0 0
        %884 = vmatprep.subr.bf16.mxu0 0
        %885 = vmatpush2.bf16.msra.mxu0 0
        %886 = vmatprep.subr.bf16.mxu0 0
        %887 = vmatpush2.bf16.msra.mxu0 0
        %888 = vmatprep.subr.bf16.mxu0 0
        %889 = vmatpush2.bf16.msra.mxu0 0
        %890 = vmatprep.subr.bf16.mxu0 0
        %891 = vmatpush2.bf16.msra.mxu0 0
        %892 = vmatprep.subr.bf16.mxu0 0
        %893 = vmatpush2.bf16.msra.mxu0 0
        %894 = vmatprep.subr.bf16.mxu0 0
        %895 = vmatpush2.bf16.msra.mxu0 0
        %896 = vmatprep.subr.bf16.mxu0 0
        %897 = vmatpush2.bf16.msra.mxu0 0
        %898 = vmatprep.mubr.bf16.mxu0 0
        %899 = vmatmul.mubr.bf16.gmra.mxu0 %v855
        %v900 = vpop.f32.mrf.mxu0
        %v901 = vadd.f32 %v817, %v900
        %v902 = vpop.f32.mrf.mxu0
        %v903 = vadd.f32 %v821, %v902
        %v904 = vpop.f32.mrf.mxu0
        %v905 = vadd.f32 %v817, %v904
        %v906 = vpop.f32.mrf.mxu0
        %v907 = vadd.f32 %v821, %v906
        %908 = vmatprep.mubr.bf16.mxu0 0
        %909 = vmatmul.mubr.bf16.gmra.mxu0 %v858
        %v910 = vpop.f32.mrf.mxu0
        %v911 = vadd.f32 %v817, %v910
        %v912 = vpop.f32.mrf.mxu0
        %v913 = vadd.f32 %v821, %v912
        %v914 = vpop.f32.mrf.mxu0
        %v915 = vadd.f32 %v817, %v914
        %v916 = vpop.f32.mrf.mxu0
        %v917 = vadd.f32 %v821, %v916
        %918 = vmatprep.mubr.bf16.mxu0 0
        %919 = vmatmul.mubr.bf16.gmra.mxu0 %v861
        %v920 = vpop.f32.mrf.mxu0
        %v921 = vadd.f32 %v817, %v920
        %v922 = vpop.f32.mrf.mxu0
        %v923 = vadd.f32 %v821, %v922
        %v924 = vpop.f32.mrf.mxu0
        %v925 = vadd.f32 %v817, %v924
        %v926 = vpop.f32.mrf.mxu0
        %v927 = vadd.f32 %v821, %v926
        %928 = vmatprep.mubr.bf16.mxu0 0
        %929 = vmatmul.mubr.bf16.gmra.mxu0 %v864
        %v930 = vpop.f32.mrf.mxu0
        %v931 = vadd.f32 %v817, %v930
        %v932 = vpop.f32.mrf.mxu0
        %v933 = vadd.f32 %v821, %v932
        %v934 = vpop.f32.mrf.mxu0
        %v935 = vadd.f32 %v817, %v934
        %v936 = vpop.f32.mrf.mxu0
        %v937 = vadd.f32 %v821, %v936
        %938 = vdwg.mxu0
        %v939 = vpack.c.bf16 %v631, %v627
        %v940 = vpack.c.bf16 %v641, %v637
        %v941 = vpack.c.bf16 %v651, %v647
        %v942 = vpack.c.bf16 %v661, %v657
        %v943 = vpack.c.bf16 %v633, %v629
        %v944 = vpack.c.bf16 %v643, %v639
        %v945 = vpack.c.bf16 %v653, %v649
        %v946 = vpack.c.bf16 %v663, %v659
        %947 = vmatprep.subr.bf16.mxu0 0
        %948 = vmatpush1.bf16.xpose.msra.mxu0 0
        %949 = vmatprep.subr.bf16.mxu0 0
        %950 = vmatpush1.bf16.xpose.msra.mxu0 0
        %951 = vmatprep.subr.bf16.mxu0 0
        %952 = vmatpush1.bf16.xpose.msra.mxu0 0
        %953 = vmatprep.subr.bf16.mxu0 0
        %954 = vmatpush1.bf16.xpose.msra.mxu0 0
        %955 = vmatprep.subr.bf16.mxu0 0
        %956 = vmatpush1.bf16.xpose.msra.mxu0 %v942
        %957 = vmatprep.subr.bf16.mxu0 0
        %958 = vmatpush1.bf16.xpose.msra.mxu0 %v941
        %959 = vmatprep.subr.bf16.mxu0 0
        %960 = vmatpush1.bf16.xpose.msra.mxu0 %v940
        %961 = vmatprep.subr.bf16.mxu0 0
        %962 = vmatpush1.bf16.xpose.msra.mxu0 %v939
        %963 = vmatprep.subr.bf16.mxu0 0
        %964 = vmatpush2.bf16.xpose.msra.mxu0 0
        %965 = vmatprep.subr.bf16.mxu0 0
        %966 = vmatpush2.bf16.xpose.msra.mxu0 0
        %967 = vmatprep.subr.bf16.mxu0 0
        %968 = vmatpush2.bf16.xpose.msra.mxu0 0
        %969 = vmatprep.subr.bf16.mxu0 0
        %970 = vmatpush2.bf16.xpose.msra.mxu0 0
        %971 = vmatprep.subr.bf16.mxu0 0
        %972 = vmatpush2.bf16.xpose.msra.mxu0 0
        %973 = vmatprep.subr.bf16.mxu0 0
        %974 = vmatpush2.bf16.xpose.msra.mxu0 0
        %975 = vmatprep.subr.bf16.mxu0 0
        %976 = vmatpush2.bf16.xpose.msra.mxu0 0
        %977 = vmatprep.subr.bf16.mxu0 0
        %978 = vmatpush2.bf16.xpose.msra.mxu0 0
        %979 = vmatprep.mubr.bf16.mxu0 0
        %980 = vmatmul.mubr.bf16.gmra.mxu0 %v526
        %v981 = vpop.f32.mrf.mxu0
        %v982 = vadd.f32 0.0, %v981
        %v983 = vpop.f32.mrf.mxu0
        %v984 = vpop.f32.mrf.mxu0
        %v985 = vadd.f32 0.0, %v984
        %v986 = vpop.f32.mrf.mxu0
        %987 = vmatprep.mubr.bf16.mxu0 0
        %988 = vmatmul.mubr.bf16.gmra.mxu0 %v527
        %v989 = vpop.f32.mrf.mxu0
        %v990 = vadd.f32 0.0, %v989
        %v991 = vpop.f32.mrf.mxu0
        %v992 = vpop.f32.mrf.mxu0
        %v993 = vadd.f32 0.0, %v992
        %v994 = vpop.f32.mrf.mxu0
        %995 = vdwg.mxu0
        %vm996 = vcmask 523264
        %v997 = vsel %vm996, %v982, -inf
        %998 = vmax.xlane.f32.xlu0 %v997
        %v999 = vpop.xlane.xlu0 %998
        %v1000 = vsel %vm996, %v985, -inf
        %1001 = vmax.xlane.f32.xlu0 %v1000
        %v1002 = vpop.xlane.xlu0 %1001
        %v1003 = vsel %vm996, %v990, -inf
        %1004 = vmax.xlane.f32.xlu0 %v1003
        %v1005 = vpop.xlane.xlu0 %1004
        %v1006 = vsel %vm996, %v993, -inf
        %1007 = vmax.xlane.f32.xlu0 %v1006
        %v1008 = vpop.xlane.xlu0 %1007
        %v1009 = vsub.f32 %v982, %v999
        %v1010 = vsub.f32 %v985, %v1002
        %v1011 = vsub.f32 %v990, %v1005
        %v1012 = vsub.f32 %v993, %v1008
        %v1013 = vmul.f32 %v1009, 1.442695
        %v1014 = vpow.pop %v1013
        %v1015 = vmul.f32 %v1010, 1.442695
        %v1016 = vpow.pop %v1015
        %v1017 = vmul.f32 %v1011, 1.442695
        %v1018 = vpow.pop %v1017
        %v1019 = vmul.f32 %v1012, 1.442695
        %v1020 = vpow.pop %v1019
        %v1021 = vsel %vm996, %v1014, 0.0
        %1022 = vadd.xlane.f32.xlu0 %v1021
        %v1023 = vpop.xlane.xlu0 %1022
        %v1024 = vsel %vm996, %v1016, 0.0
        %1025 = vadd.xlane.f32.xlu0 %v1024
        %v1026 = vpop.xlane.xlu0 %1025
        %v1027 = vsel %vm996, %v1018, 0.0
        %1028 = vadd.xlane.f32.xlu0 %v1027
        %v1029 = vpop.xlane.xlu0 %1028
        %v1030 = vsel %vm996, %v1020, 0.0
        %1031 = vadd.xlane.f32.xlu0 %v1030
        %v1032 = vpop.xlane.xlu0 %1031
        %v1033 = vrcp.pop %v1023
        %v1034 = vrcp.pop %v1026
        %v1035 = vrcp.pop %v1029
        %v1036 = vrcp.pop %v1032
        %v1037 = vmul.f32 %v1014, %v1033
        %v1038 = vmul.f32 %v1016, %v1034
        %v1039 = vmul.f32 %v1018, %v1035
        %v1040 = vmul.f32 %v1020, %v1036
        %v1041 = vpack.c.bf16 %v1038, %v1037
        %v1042 = vpack.c.bf16 %v1040, %v1039
        %v1043 = vpack.c.bf16 %v768, %v764
        %v1044 = vpack.c.bf16 %v778, %v774
        %v1045 = vpack.c.bf16 %v788, %v784
        %v1046 = vpack.c.bf16 %v798, %v794
        %v1047 = vpack.c.bf16 %v770, %v766
        %v1048 = vpack.c.bf16 %v780, %v776
        %v1049 = vpack.c.bf16 %v790, %v786
        %v1050 = vpack.c.bf16 %v800, %v796
        %1051 = vmatprep.subr.bf16.mxu0 0
        %1052 = vmatpush1.bf16.xpose.msra.mxu0 0
        %1053 = vmatprep.subr.bf16.mxu0 0
        %1054 = vmatpush1.bf16.xpose.msra.mxu0 0
        %1055 = vmatprep.subr.bf16.mxu0 0
        %1056 = vmatpush1.bf16.xpose.msra.mxu0 0
        %1057 = vmatprep.subr.bf16.mxu0 0
        %1058 = vmatpush1.bf16.xpose.msra.mxu0 0
        %1059 = vmatprep.subr.bf16.mxu0 0
        %1060 = vmatpush1.bf16.xpose.msra.mxu0 %v1046
        %1061 = vmatprep.subr.bf16.mxu0 0
        %1062 = vmatpush1.bf16.xpose.msra.mxu0 %v1045
        %1063 = vmatprep.subr.bf16.mxu0 0
        %1064 = vmatpush1.bf16.xpose.msra.mxu0 %v1044
        %1065 = vmatprep.subr.bf16.mxu0 0
        %1066 = vmatpush1.bf16.xpose.msra.mxu0 %v1043
        %1067 = vmatprep.subr.bf16.mxu0 0
        %1068 = vmatpush2.bf16.xpose.msra.mxu0 0
        %1069 = vmatprep.subr.bf16.mxu0 0
        %1070 = vmatpush2.bf16.xpose.msra.mxu0 0
        %1071 = vmatprep.subr.bf16.mxu0 0
        %1072 = vmatpush2.bf16.xpose.msra.mxu0 0
        %1073 = vmatprep.subr.bf16.mxu0 0
        %1074 = vmatpush2.bf16.xpose.msra.mxu0 0
        %1075 = vmatprep.subr.bf16.mxu0 0
        %1076 = vmatpush2.bf16.xpose.msra.mxu0 0
        %1077 = vmatprep.subr.bf16.mxu0 0
        %1078 = vmatpush2.bf16.xpose.msra.mxu0 0
        %1079 = vmatprep.subr.bf16.mxu0 0
        %1080 = vmatpush2.bf16.xpose.msra.mxu0 0
        %1081 = vmatprep.subr.bf16.mxu0 0
        %1082 = vmatpush2.bf16.xpose.msra.mxu0 0
        %1083 = vmatprep.mubr.bf16.mxu0 0
        %1084 = vmatmul.mubr.bf16.gmra.mxu0 %v526
        %v1085 = vpop.f32.mrf.mxu0
        %v1086 = vadd.f32 0.0, %v1085
        %v1087 = vpop.f32.mrf.mxu0
        %v1088 = vpop.f32.mrf.mxu0
        %v1089 = vadd.f32 0.0, %v1088
        %v1090 = vpop.f32.mrf.mxu0
        %1091 = vmatprep.mubr.bf16.mxu0 0
        %1092 = vmatmul.mubr.bf16.gmra.mxu0 %v527
        %v1093 = vpop.f32.mrf.mxu0
        %v1094 = vadd.f32 0.0, %v1093
        %v1095 = vpop.f32.mrf.mxu0
        %v1096 = vpop.f32.mrf.mxu0
        %v1097 = vadd.f32 0.0, %v1096
        %v1098 = vpop.f32.mrf.mxu0
        %1099 = vdwg.mxu0
        %v1100 = vsel %vm996, %v1086, -inf
        %1101 = vmax.xlane.f32.xlu0 %v1100
        %v1102 = vpop.xlane.xlu0 %1101
        %v1103 = vsel %vm996, %v1089, -inf
        %1104 = vmax.xlane.f32.xlu0 %v1103
        %v1105 = vpop.xlane.xlu0 %1104
        %v1106 = vsel %vm996, %v1094, -inf
        %1107 = vmax.xlane.f32.xlu0 %v1106
        %v1108 = vpop.xlane.xlu0 %1107
        %v1109 = vsel %vm996, %v1097, -inf
        %1110 = vmax.xlane.f32.xlu0 %v1109
        %v1111 = vpop.xlane.xlu0 %1110
        %v1112 = vsub.f32 %v1086, %v1102
        %v1113 = vsub.f32 %v1089, %v1105
        %v1114 = vsub.f32 %v1094, %v1108
        %v1115 = vsub.f32 %v1097, %v1111
        %v1116 = vmul.f32 %v1112, 1.442695
        %v1117 = vpow.pop %v1116
        %v1118 = vmul.f32 %v1113, 1.442695
        %v1119 = vpow.pop %v1118
        %v1120 = vmul.f32 %v1114, 1.442695
        %v1121 = vpow.pop %v1120
        %v1122 = vmul.f32 %v1115, 1.442695
        %v1123 = vpow.pop %v1122
        %v1124 = vsel %vm996, %v1117, 0.0
        %1125 = vadd.xlane.f32.xlu0 %v1124
        %v1126 = vpop.xlane.xlu0 %1125
        %v1127 = vsel %vm996, %v1119, 0.0
        %1128 = vadd.xlane.f32.xlu0 %v1127
        %v1129 = vpop.xlane.xlu0 %1128
        %v1130 = vsel %vm996, %v1121, 0.0
        %1131 = vadd.xlane.f32.xlu0 %v1130
        %v1132 = vpop.xlane.xlu0 %1131
        %v1133 = vsel %vm996, %v1123, 0.0
        %1134 = vadd.xlane.f32.xlu0 %v1133
        %v1135 = vpop.xlane.xlu0 %1134
        %v1136 = vrcp.pop %v1126
        %v1137 = vrcp.pop %v1129
        %v1138 = vrcp.pop %v1132
        %v1139 = vrcp.pop %v1135
        %v1140 = vmul.f32 %v1117, %v1136
        %v1141 = vmul.f32 %v1119, %v1137
        %v1142 = vmul.f32 %v1121, %v1138
        %v1143 = vmul.f32 %v1123, %v1139
        %v1144 = vpack.c.bf16 %v1141, %v1140
        %v1145 = vpack.c.bf16 %v1143, %v1142
        %v1147 = vsel %vm996, %v1144, 0
        %v1150 = vsel %vm996, %v1145, 0
        %1152 = vmatprep.subr.bf16.mxu0 0
        %1153 = vmatpush1.bf16.msra.mxu0 0
        %1154 = vmatprep.subr.bf16.mxu0 0
        %1155 = vmatpush1.bf16.msra.mxu0 0
        %1156 = vmatprep.subr.bf16.mxu0 0
        %1157 = vmatpush1.bf16.msra.mxu0 0
        %1158 = vmatprep.subr.bf16.mxu0 0
        %1159 = vmatpush1.bf16.msra.mxu0 0
        %1160 = vmatprep.subr.bf16.mxu0 0
        %1161 = vmatpush1.bf16.msra.mxu0 %v1050
        %1162 = vmatprep.subr.bf16.mxu0 0
        %1163 = vmatpush1.bf16.msra.mxu0 %v1049
        %1164 = vmatprep.subr.bf16.mxu0 0
        %1165 = vmatpush1.bf16.msra.mxu0 %v1048
        %1166 = vmatprep.subr.bf16.mxu0 0
        %1167 = vmatpush1.bf16.msra.mxu0 %v1047
        %1168 = vmatprep.subr.bf16.mxu0 0
        %1169 = vmatpush2.bf16.msra.mxu0 0
        %1170 = vmatprep.subr.bf16.mxu0 0
        %1171 = vmatpush2.bf16.msra.mxu0 0
        %1172 = vmatprep.subr.bf16.mxu0 0
        %1173 = vmatpush2.bf16.msra.mxu0 0
        %1174 = vmatprep.subr.bf16.mxu0 0
        %1175 = vmatpush2.bf16.msra.mxu0 0
        %1176 = vmatprep.subr.bf16.mxu0 0
        %1177 = vmatpush2.bf16.msra.mxu0 0
        %1178 = vmatprep.subr.bf16.mxu0 0
        %1179 = vmatpush2.bf16.msra.mxu0 0
        %1180 = vmatprep.subr.bf16.mxu0 0
        %1181 = vmatpush2.bf16.msra.mxu0 0
        %1182 = vmatprep.subr.bf16.mxu0 0
        %1183 = vmatpush2.bf16.msra.mxu0 0
        %1184 = vmatprep.mubr.bf16.mxu0 0
        %1185 = vmatmul.mubr.bf16.gmra.mxu0 %v1147
        %v1186 = vpop.f32.mrf.mxu0
        %v1187 = vadd.f32 0.0, %v1186
        %v1188 = vpop.f32.mrf.mxu0
        %v1189 = vpop.f32.mrf.mxu0
        %v1190 = vadd.f32 0.0, %v1189
        %v1191 = vpop.f32.mrf.mxu0
        %1192 = vmatprep.mubr.bf16.mxu0 0
        %1193 = vmatmul.mubr.bf16.gmra.mxu0 %v1150
        %v1194 = vpop.f32.mrf.mxu0
        %v1195 = vadd.f32 0.0, %v1194
        %v1196 = vpop.f32.mrf.mxu0
        %v1197 = vpop.f32.mrf.mxu0
        %v1198 = vadd.f32 0.0, %v1197
        %v1199 = vpop.f32.mrf.mxu0
        %1200 = vdwg.mxu0
        %v1202 = vsel %vm996, %v1041, 0
        %v1205 = vsel %vm996, %v1042, 0
        %1207 = vmatprep.subr.bf16.mxu0 0
        %1208 = vmatpush1.bf16.msra.mxu0 0
        %1209 = vmatprep.subr.bf16.mxu0 0
        %1210 = vmatpush1.bf16.msra.mxu0 0
        %1211 = vmatprep.subr.bf16.mxu0 0
        %1212 = vmatpush1.bf16.msra.mxu0 0
        %1213 = vmatprep.subr.bf16.mxu0 0
        %1214 = vmatpush1.bf16.msra.mxu0 0
        %1215 = vmatprep.subr.bf16.mxu0 0
        %1216 = vmatpush1.bf16.msra.mxu0 %v946
        %1217 = vmatprep.subr.bf16.mxu0 0
        %1218 = vmatpush1.bf16.msra.mxu0 %v945
        %1219 = vmatprep.subr.bf16.mxu0 0
        %1220 = vmatpush1.bf16.msra.mxu0 %v944
        %1221 = vmatprep.subr.bf16.mxu0 0
        %1222 = vmatpush1.bf16.msra.mxu0 %v943
        %1223 = vmatprep.subr.bf16.mxu0 0
        %1224 = vmatpush2.bf16.msra.mxu0 0
        %1225 = vmatprep.subr.bf16.mxu0 0
        %1226 = vmatpush2.bf16.msra.mxu0 0
        %1227 = vmatprep.subr.bf16.mxu0 0
        %1228 = vmatpush2.bf16.msra.mxu0 0
        %1229 = vmatprep.subr.bf16.mxu0 0
        %1230 = vmatpush2.bf16.msra.mxu0 0
        %1231 = vmatprep.subr.bf16.mxu0 0
        %1232 = vmatpush2.bf16.msra.mxu0 0
        %1233 = vmatprep.subr.bf16.mxu0 0
        %1234 = vmatpush2.bf16.msra.mxu0 0
        %1235 = vmatprep.subr.bf16.mxu0 0
        %1236 = vmatpush2.bf16.msra.mxu0 0
        %1237 = vmatprep.subr.bf16.mxu0 0
        %1238 = vmatpush2.bf16.msra.mxu0 0
        %1239 = vmatprep.mubr.bf16.mxu0 0
        %1240 = vmatmul.mubr.bf16.gmra.mxu0 %v1202
        %v1241 = vpop.f32.mrf.mxu0
        %v1242 = vadd.f32 %v1187, %v1241
        %v1243 = vpop.f32.mrf.mxu0
        %v1244 = vpop.f32.mrf.mxu0
        %v1245 = vadd.f32 %v1190, %v1244
        %v1246 = vpop.f32.mrf.mxu0
        %1247 = vmatprep.mubr.bf16.mxu0 0
        %1248 = vmatmul.mubr.bf16.gmra.mxu0 %v1205
        %v1249 = vpop.f32.mrf.mxu0
        %v1250 = vadd.f32 %v1195, %v1249
        %v1251 = vpop.f32.mrf.mxu0
        %v1252 = vpop.f32.mrf.mxu0
        %v1253 = vadd.f32 %v1198, %v1252
        %v1254 = vpop.f32.mrf.mxu0
        %1255 = vdwg.mxu0
        %v1256 = vpack.c.bf16 %v905, %v901
        %v1257 = vpack.c.bf16 %v915, %v911
        %v1258 = vpack.c.bf16 %v925, %v921
        %v1259 = vpack.c.bf16 %v935, %v931
        %v1260 = vpack.c.bf16 %v907, %v903
        %v1261 = vpack.c.bf16 %v917, %v913
        %v1262 = vpack.c.bf16 %v927, %v923
        %v1263 = vpack.c.bf16 %v937, %v933
        %1264 = vmatprep.subr.bf16.mxu0 0
        %1265 = vmatpush1.bf16.xpose.msra.mxu0 0
        %1266 = vmatprep.subr.bf16.mxu0 0
        %1267 = vmatpush1.bf16.xpose.msra.mxu0 0
        %1268 = vmatprep.subr.bf16.mxu0 0
        %1269 = vmatpush1.bf16.xpose.msra.mxu0 0
        %1270 = vmatprep.subr.bf16.mxu0 0
        %1271 = vmatpush1.bf16.xpose.msra.mxu0 0
        %1272 = vmatprep.subr.bf16.mxu0 0
        %1273 = vmatpush1.bf16.xpose.msra.mxu0 %v1259
        %1274 = vmatprep.subr.bf16.mxu0 0
        %1275 = vmatpush1.bf16.xpose.msra.mxu0 %v1258
        %1276 = vmatprep.subr.bf16.mxu0 0
        %1277 = vmatpush1.bf16.xpose.msra.mxu0 %v1257
        %1278 = vmatprep.subr.bf16.mxu0 0
        %1279 = vmatpush1.bf16.xpose.msra.mxu0 %v1256
        %1280 = vmatprep.subr.bf16.mxu0 0
        %1281 = vmatpush2.bf16.xpose.msra.mxu0 0
        %1282 = vmatprep.subr.bf16.mxu0 0
        %1283 = vmatpush2.bf16.xpose.msra.mxu0 0
        %1284 = vmatprep.subr.bf16.mxu0 0
        %1285 = vmatpush2.bf16.xpose.msra.mxu0 0
        %1286 = vmatprep.subr.bf16.mxu0 0
        %1287 = vmatpush2.bf16.xpose.msra.mxu0 0
        %1288 = vmatprep.subr.bf16.mxu0 0
        %1289 = vmatpush2.bf16.xpose.msra.mxu0 0
        %1290 = vmatprep.subr.bf16.mxu0 0
        %1291 = vmatpush2.bf16.xpose.msra.mxu0 0
        %1292 = vmatprep.subr.bf16.mxu0 0
        %1293 = vmatpush2.bf16.xpose.msra.mxu0 0
        %1294 = vmatprep.subr.bf16.mxu0 0
        %1295 = vmatpush2.bf16.xpose.msra.mxu0 0
        %1296 = vmatprep.mubr.bf16.mxu0 0
        %1297 = vmatmul.mubr.bf16.gmra.mxu0 %v526
        %v1298 = vpop.f32.mrf.mxu0
        %v1299 = vadd.f32 0.0, %v1298
        %v1300 = vpop.f32.mrf.mxu0
        %v1301 = vpop.f32.mrf.mxu0
        %v1302 = vadd.f32 0.0, %v1301
        %v1303 = vpop.f32.mrf.mxu0
        %1304 = vmatprep.mubr.bf16.mxu0 0
        %1305 = vmatmul.mubr.bf16.gmra.mxu0 %v527
        %v1306 = vpop.f32.mrf.mxu0
        %v1307 = vadd.f32 0.0, %v1306
        %v1308 = vpop.f32.mrf.mxu0
        %v1309 = vpop.f32.mrf.mxu0
        %v1310 = vadd.f32 0.0, %v1309
        %v1311 = vpop.f32.mrf.mxu0
        %1312 = vdwg.mxu0
        %v1313 = vsel %vm996, %v1299, -inf
        %1314 = vmax.xlane.f32.xlu0 %v1313
        %v1315 = vpop.xlane.xlu0 %1314
        %v1316 = vsel %vm996, %v1302, -inf
        %1317 = vmax.xlane.f32.xlu0 %v1316
        %v1318 = vpop.xlane.xlu0 %1317
        %v1319 = vsel %vm996, %v1307, -inf
        %1320 = vmax.xlane.f32.xlu0 %v1319
        %v1321 = vpop.xlane.xlu0 %1320
        %v1322 = vsel %vm996, %v1310, -inf
        %1323 = vmax.xlane.f32.xlu0 %v1322
        %v1324 = vpop.xlane.xlu0 %1323
        %v1325 = vsub.f32 %v1299, %v1315
        %v1326 = vsub.f32 %v1302, %v1318
        %v1327 = vsub.f32 %v1307, %v1321
        %v1328 = vsub.f32 %v1310, %v1324
        %v1329 = vmul.f32 %v1325, 1.442695
        %v1330 = vpow.pop %v1329
        %v1331 = vmul.f32 %v1326, 1.442695
        %v1332 = vpow.pop %v1331
        %v1333 = vmul.f32 %v1327, 1.442695
        %v1334 = vpow.pop %v1333
        %v1335 = vmul.f32 %v1328, 1.442695
        %v1336 = vpow.pop %v1335
        %v1337 = vsel %vm996, %v1330, 0.0
        %1338 = vadd.xlane.f32.xlu0 %v1337
        %v1339 = vpop.xlane.xlu0 %1338
        %v1340 = vsel %vm996, %v1332, 0.0
        %1341 = vadd.xlane.f32.xlu0 %v1340
        %v1342 = vpop.xlane.xlu0 %1341
        %v1343 = vsel %vm996, %v1334, 0.0
        %1344 = vadd.xlane.f32.xlu0 %v1343
        %v1345 = vpop.xlane.xlu0 %1344
        %v1346 = vsel %vm996, %v1336, 0.0
        %1347 = vadd.xlane.f32.xlu0 %v1346
        %v1348 = vpop.xlane.xlu0 %1347
        %v1349 = vrcp.pop %v1339
        %v1350 = vrcp.pop %v1342
        %v1351 = vrcp.pop %v1345
        %v1352 = vrcp.pop %v1348
        %v1353 = vmul.f32 %v1330, %v1349
        %v1354 = vmul.f32 %v1332, %v1350
        %v1355 = vmul.f32 %v1334, %v1351
        %v1356 = vmul.f32 %v1336, %v1352
        %v1357 = vpack.c.bf16 %v1354, %v1353
        %v1358 = vpack.c.bf16 %v1356, %v1355
        %v1360 = vsel %vm996, %v1357, 0
        %v1363 = vsel %vm996, %v1358, 0
        %1365 = vmatprep.subr.bf16.mxu0 0
        %1366 = vmatpush1.bf16.msra.mxu0 0
        %1367 = vmatprep.subr.bf16.mxu0 0
        %1368 = vmatpush1.bf16.msra.mxu0 0
        %1369 = vmatprep.subr.bf16.mxu0 0
        %1370 = vmatpush1.bf16.msra.mxu0 0
        %1371 = vmatprep.subr.bf16.mxu0 0
        %1372 = vmatpush1.bf16.msra.mxu0 0
        %1373 = vmatprep.subr.bf16.mxu0 0
        %1374 = vmatpush1.bf16.msra.mxu0 %v1263
        %1375 = vmatprep.subr.bf16.mxu0 0
        %1376 = vmatpush1.bf16.msra.mxu0 %v1262
        %1377 = vmatprep.subr.bf16.mxu0 0
        %1378 = vmatpush1.bf16.msra.mxu0 %v1261
        %1379 = vmatprep.subr.bf16.mxu0 0
        %1380 = vmatpush1.bf16.msra.mxu0 %v1260
        %1381 = vmatprep.subr.bf16.mxu0 0
        %1382 = vmatpush2.bf16.msra.mxu0 0
        %1383 = vmatprep.subr.bf16.mxu0 0
        %1384 = vmatpush2.bf16.msra.mxu0 0
        %1385 = vmatprep.subr.bf16.mxu0 0
        %1386 = vmatpush2.bf16.msra.mxu0 0
        %1387 = vmatprep.subr.bf16.mxu0 0
        %1388 = vmatpush2.bf16.msra.mxu0 0
        %1389 = vmatprep.subr.bf16.mxu0 0
        %1390 = vmatpush2.bf16.msra.mxu0 0
        %1391 = vmatprep.subr.bf16.mxu0 0
        %1392 = vmatpush2.bf16.msra.mxu0 0
        %1393 = vmatprep.subr.bf16.mxu0 0
        %1394 = vmatpush2.bf16.msra.mxu0 0
        %1395 = vmatprep.subr.bf16.mxu0 0
        %1396 = vmatpush2.bf16.msra.mxu0 0
        %1397 = vmatprep.mubr.bf16.mxu0 0
        %1398 = vmatmul.mubr.bf16.gmra.mxu0 %v1360
        %v1399 = vpop.f32.mrf.mxu0
        %v1400 = vadd.f32 0.0, %v1399
        %v1401 = vpop.f32.mrf.mxu0
        %v1402 = vpop.f32.mrf.mxu0
        %v1403 = vadd.f32 0.0, %v1402
        %v1404 = vpop.f32.mrf.mxu0
        %1405 = vmatprep.mubr.bf16.mxu0 0
        %1406 = vmatmul.mubr.bf16.gmra.mxu0 %v1363
        %v1407 = vpop.f32.mrf.mxu0
        %v1408 = vadd.f32 0.0, %v1407
        %v1409 = vpop.f32.mrf.mxu0
        %v1410 = vpop.f32.mrf.mxu0
        %v1411 = vadd.f32 0.0, %v1410
        %v1412 = vpop.f32.mrf.mxu0
        %1413 = vdwg.mxu0
        %v1414 = vadd.f32 %v1242, %v1400
        %v1415 = vadd.f32 %v1245, %v1403
        %v1416 = vadd.f32 %v1250, %v1408
        %v1417 = vadd.f32 %v1253, %v1411
        %v1418 = vpack.c.bf16 %v1415, %v1414
        %v1419 = vpack.c.bf16 %v1417, %v1416
        %v1420 = vld [vmem:[%s11] sm:$0xf]
        %v1421 = vld [vmem:[%s11 + $0x4] sm:$0xf]
        %v1422 = vld [vmem:[%s11 + $0x8] sm:$0xf]
        %v1423 = vld [vmem:[%s11 + $0xc] sm:$0xf]
        %v1424 = vld [vmem:[%s11 + $0x10] sm:$0xf]
        %v1425 = vld [vmem:[%s11 + $0x14] sm:$0xf]
        %v1426 = vld [vmem:[%s11 + $0x18] sm:$0xf]
        %v1427 = vld [vmem:[%s11 + $0x1c] sm:$0xf]
        %v1428 = vld [vmem:[%s11 + $0x20] sm:$0xf]
        %v1429 = vld [vmem:[%s11 + $0x24] sm:$0xf]
        %v1430 = vld [vmem:[%s11 + $0x28] sm:$0xf]
        %v1431 = vld [vmem:[%s11 + $0x2c] sm:$0xf]
        %v1432 = vld [vmem:[%s11 + $0x30] sm:$0xf]
        %v1433 = vld [vmem:[%s11 + $0x34] sm:$0xf]
        %v1434 = vld [vmem:[%s11 + $0x38] sm:$0xf]
        %v1435 = vld [vmem:[%s11 + $0x3c] sm:$0xf]
        %v1436 = vld [vmem:[%s12] sm:$0x1]
        %v1438 = vlaneseq
        %v1439 = vshrl.u32 %v1438, 7
        %v1440 = vsub.s32 0, %v1439
        %v1441 = vrot.slane %v1436, %v1440
        %v1459 = vunpack.c.l.b16 %v1420
        %v1460 = vunpack.c.l.b16 %v1421
        %v1461 = vunpack.c.l.b16 %v1422
        %v1462 = vunpack.c.l.b16 %v1423
        %v1463 = vunpack.c.l.b16 %v1424
        %v1464 = vunpack.c.l.b16 %v1425
        %v1465 = vunpack.c.l.b16 %v1426
        %v1466 = vunpack.c.l.b16 %v1427
        %v1467 = vunpack.c.l.b16 %v1428
        %v1468 = vunpack.c.l.b16 %v1429
        %v1469 = vunpack.c.l.b16 %v1430
        %v1470 = vunpack.c.l.b16 %v1431
        %v1471 = vunpack.c.l.b16 %v1432
        %v1472 = vunpack.c.l.b16 %v1433
        %v1473 = vunpack.c.l.b16 %v1434
        %v1474 = vunpack.c.l.b16 %v1435
        %v1475 = vpack.c.b16 %v1460, %v1459
        %v1476 = vpack.c.b16 %v1462, %v1461
        %v1477 = vpack.c.b16 %v1464, %v1463
        %v1478 = vpack.c.b16 %v1466, %v1465
        %v1479 = vpack.c.b16 %v1468, %v1467
        %v1480 = vpack.c.b16 %v1470, %v1469
        %v1481 = vpack.c.b16 %v1472, %v1471
        %v1482 = vpack.c.b16 %v1474, %v1473
        %1491 = vmatprep.subr.bf16.mxu0 0
        %1492 = vmatpush1.bf16.msra.mxu0 %v1482
        %1493 = vmatprep.subr.bf16.mxu0 0
        %1494 = vmatpush1.bf16.msra.mxu0 %v1481
        %1495 = vmatprep.subr.bf16.mxu0 0
        %1496 = vmatpush1.bf16.msra.mxu0 %v1480
        %1497 = vmatprep.subr.bf16.mxu0 0
        %1498 = vmatpush1.bf16.msra.mxu0 %v1479
        %1499 = vmatprep.subr.bf16.mxu0 0
        %1500 = vmatpush1.bf16.msra.mxu0 %v1478
        %1501 = vmatprep.subr.bf16.mxu0 0
        %1502 = vmatpush1.bf16.msra.mxu0 %v1477
        %1503 = vmatprep.subr.bf16.mxu0 0
        %1504 = vmatpush1.bf16.msra.mxu0 %v1476
        %1505 = vmatprep.subr.bf16.mxu0 0
        %1506 = vmatpush1.bf16.msra.mxu0 %v1475
        %1507 = vmatprep.subr.bf16.mxu0 0
        %1508 = vmatpush2.bf16.msra.mxu0 0
        %1509 = vmatprep.subr.bf16.mxu0 0
        %1510 = vmatpush2.bf16.msra.mxu0 0
        %1511 = vmatprep.subr.bf16.mxu0 0
        %1512 = vmatpush2.bf16.msra.mxu0 0
        %1513 = vmatprep.subr.bf16.mxu0 0
        %1514 = vmatpush2.bf16.msra.mxu0 0
        %1515 = vmatprep.subr.bf16.mxu0 0
        %1516 = vmatpush2.bf16.msra.mxu0 0
        %1517 = vmatprep.subr.bf16.mxu0 0
        %1518 = vmatpush2.bf16.msra.mxu0 0
        %1519 = vmatprep.subr.bf16.mxu0 0
        %1520 = vmatpush2.bf16.msra.mxu0 0
        %1521 = vmatprep.subr.bf16.mxu0 0
        %1522 = vmatpush2.bf16.msra.mxu0 0
        %1523 = vmatprep.mubr.bf16.mxu0 0
        %1524 = vmatmul.mubr.bf16.gmra.mxu0 %v1418
        %v1525 = vpop.f32.mrf.mxu0
        %v1526 = vadd.f32 %v1441, %v1525
        %v1527 = vpop.f32.mrf.mxu0
        %v1528 = vpop.f32.mrf.mxu0
        %v1529 = vadd.f32 %v1441, %v1528
        %v1530 = vpop.f32.mrf.mxu0
        %1531 = vmatprep.mubr.bf16.mxu0 0
        %1532 = vmatmul.mubr.bf16.gmra.mxu0 %v1419
        %v1533 = vpop.f32.mrf.mxu0
        %v1534 = vadd.f32 %v1441, %v1533
        %v1535 = vpop.f32.mrf.mxu0
        %v1536 = vpop.f32.mrf.mxu0
        %v1537 = vadd.f32 %v1441, %v1536
        %v1538 = vpop.f32.mrf.mxu0
        %1539 = vdwg.mxu0
        %v1540 = vmax.f32 %v1526, 0.0
        %v1541 = vmax.f32 %v1529, 0.0
        %v1542 = vmax.f32 %v1534, 0.0
        %v1543 = vmax.f32 %v1537, 0.0
        %1544 = vst [vmem:[%s433] sm:$0xff] %v1540
        %1545 = vst [vmem:[%s433 + $0x8] sm:$0xff] %v1541
        %1546 = vst [vmem:[%s433 + $0x10] sm:$0xff] %v1542
        %1547 = vst [vmem:[%s433 + $0x18] sm:$0xff] %v1543
        %s1548 = sand.u32 %s309, 1
        %s1549 = scalar_lea.sflag [#allocation4], %s1548
        %s1550 = sand.u32 %s309, 1
        %s1551 = smul.addr %s1550, 32
        %s1552 = scalar_lea.vmem [#allocation5], %s1551
        // Predicated region
        $region77: #{tpu_custom_call.1} parent=71 // pred_check
          %p1553 = pneg %p319
        $region78: #{tpu_custom_call.1} parent=71 // pred_check_branch
          %1555 = sbr.rel (%p1553) target = $region80
        $region79: #{tpu_custom_call.1} parent=71 // pred_region
          %s1556 = smul.u32 4, %s28
          %s1558 = ssub.s32 512, 512
          %1559 = vsyncadd %s1549, %s1558
          %s1560 = smul.addr %s1556, 128
          %s1561 = scalar_lea.hbm %s13, %s1560
          %s1562 = sshll.u32 %s1552, 4
          %s1563 = int_to_ptr.vmem [resolvable:$true] %s1562
          %1568 = dma.vmem_to_hbm [thread:$0]  %s1563, 512, %s1561, %s1549, 128, 128, 8
        $region80: #{tpu_custom_call.1} parent=71 // pred_fallthru
          _
      $region72: #{tpu_custom_call.1} parent=5 // pred_fallthru
        _
      %p1569 = scmp.le.s32.totalorder 2, %s23
      // Predicated region
      $region81: #{tpu_custom_call.1} parent=5 // pred_check
        %p1570 = pneg %p1569
      $region82: #{tpu_custom_call.1} parent=5 // pred_check_branch
        %1572 = sbr.rel (%p1570) target = $region84
      $region83: #{tpu_custom_call.1} parent=5 // pred_region
        %s1573 = ssub.s32 %s23, 2
        // Predicated region
        $region85: #{tpu_custom_call.1} parent=83 // pred_check
          %p1574 = pneg %p325
        $region86: #{tpu_custom_call.1} parent=83 // pred_check_branch
          %1576 = sbr.rel (%p1574) target = $region88
        $region87: #{tpu_custom_call.1} parent=83 // pred_region
          %s1577 = sand.u32 %s310, 1
          %s1578 = scalar_lea.sflag [#allocation4], %s1577
          %s1579 = sand.u32 %s310, 1
          %s1580 = smul.addr %s1579, 32
          %s1581 = scalar_lea.vmem [#allocation5], %s1580
          %1582 = dma.done %s1578, 512
        $region88: #{tpu_custom_call.1} parent=83 // pred_fallthru
          _
      $region84: #{tpu_custom_call.1} parent=5 // pred_fallthru
        _
    $region6: #{tpu_custom_call.1} parent=1 // loop_footer
      %s27 = sadd.s32 1, %s23
    $region7: #{tpu_custom_call.1} parent=1 // loop_footer_branch
      %22 = sbr.rel target = $region3
    $region8: #{tpu_custom_call.1} parent=1 // loop_exit
      _
    %1583 = vsyncpa [#allocation3], 1
    %s1584 = scalar_lea.sflag [#allocation3], 1
    %1585 = vsyncpa %s1584, 1
    %1586 = vsyncpa [#allocation4], 1
    %s1587 = scalar_lea.sflag [#allocation4], 1
    %1588 = vsyncpa %s1587, 1

</llo_original>
